<compile_context>
chip_gen: v7x
topology: tpu7x:2x2x1
jax: 0.10.0
libtpu: 0.0.40
codegen_flags: <defaults>
</compile_context>

<pallas_src>
import jax
import jax.numpy as jnp
from jax.experimental import pallas as pl
from jax.experimental.pallas import tpu as pltpu

LANE = 128
SUBLANE = 8


def _round_up(x, m):
    return ((x + m - 1) // m) * m


def _pad2d(a, rows, cols):
    r, c = a.shape
    return jnp.pad(a, ((0, rows - r), (0, cols - c)))


def make_cvae_kernel(n_enc, n_dec, matmul_dtype):
    """Build the kernel for an encoder with n_enc layers and a decoder with n_dec layers.

    Ref order (all padded to 128-lane multiples):
      xf, xc, eps,
      encoder hidden (w, b) * (n_enc - 1),
      we_mu, be_mu, we_lv, be_lv,               # last encoder layer split in halves
      wd0_z, wd0_c, bd0,                        # first decoder layer split over [z | xc]
      decoder (w, b) * (n_dec - 1),
      recon_out, mu_out, logvar_out.
    """

    def kernel(*refs):
        it = iter(refs)
        xf_ref = next(it)
        xc_ref = next(it)
        eps_ref = next(it)
        enc_hidden = [(next(it), next(it)) for _ in range(n_enc - 1)]
        we_mu, be_mu = next(it), next(it)
        we_lv, be_lv = next(it), next(it)
        wd0_z, wd0_c, bd0 = next(it), next(it), next(it)
        dec_rest = [(next(it), next(it)) for _ in range(n_dec - 1)]
        recon_ref, mu_ref, logvar_ref = next(it), next(it), next(it)

        def mm(x, w_ref):
            # MXU matmul: bf16 (or f32) operands, f32 accumulation.
            return jnp.dot(x.astype(matmul_dtype), w_ref[...],
                           preferred_element_type=jnp.float32)

        # ---- encoder hidden layers (ReLU) ----
        h = xf_ref[...]
        for w_ref, b_ref in enc_hidden:
            h = jnp.maximum(mm(h, w_ref) + b_ref[...], 0.0)

        # ---- last encoder layer: separate lane-aligned dots for mu and log_var ----
        mu = mm(h, we_mu) + be_mu[...]
        log_var = mm(h, we_lv) + be_lv[...]

        # ---- reparameterize (f32): z = mu + eps * exp(0.5 * log_var) ----
        std = jnp.exp(0.5 * log_var)
        z = mu + eps_ref[...] * std

        # ---- first decoder layer: split-weight dots replace concat([z, xc], axis=1) ----
        h = mm(z, wd0_z) + mm(xc_ref[...], wd0_c) + bd0[...]
        if n_dec > 1:
            h = jnp.maximum(h, 0.0)

        # ---- remaining decoder layers (ReLU on all but the last) ----
        for li, (w_ref, b_ref) in enumerate(dec_rest):
            h = mm(h, w_ref) + b_ref[...]
            if li < len(dec_rest) - 1:
                h = jnp.maximum(h, 0.0)

        recon_ref[...] = h
        mu_ref[...] = mu
        logvar_ref[...] = log_var

    return kernel


def init_params(key, in_features, out_features, in_list, out_list):
    """Deterministic parameter init mirroring CVAE.__init__ layer shapes.

    Weights are stored already transposed as [in, out]."""
    latent_dim = out_list[-1] // 2

    enc_dims = list(zip(in_list, out_list))
    in_ls = [o + in_features for o in out_list[::-1]]
    out_ls = [i + in_features for i in in_list[::-1]]
    out_ls[-1] = out_features
    in_ls[0] = in_ls[0] - latent_dim
    dec_dims = list(zip(in_ls, out_ls))

    def linear_init(k, fan_in, fan_out):
        kw, kb = jax.random.split(k)
        bound = 1.0 / (fan_in ** 0.5)
        w = jax.random.uniform(kw, (fan_in, fan_out), jnp.float32, -bound, bound)
        b = jax.random.uniform(kb, (1, fan_out), jnp.float32, -bound, bound)
        return w, b

    keys = jax.random.split(key, len(enc_dims) + len(dec_dims))
    encoder = [linear_init(keys[i], fi, fo) for i, (fi, fo) in enumerate(enc_dims)]
    decoder = [linear_init(keys[len(enc_dims) + i], fi, fo)
               for i, (fi, fo) in enumerate(dec_dims)]

    return {
        "encoder": encoder,
        "decoder": decoder,
        "latent_dim": latent_dim,
        "in_features": in_features,
        "out_features": out_features,
    }


def prepare_padded_params(params, matmul_dtype):
    """Zero-pad all feature dims to 128-lane multiples, split the last encoder layer
    into mu/log_var column halves and the first decoder layer into [z | xc] row
    blocks, and cast weight matrices (MXU operands) to `matmul_dtype`.
    Biases stay f32 (they are added post-accumulation)."""
    latent = params["latent_dim"]
    encoder = params["encoder"]
    decoder = params["decoder"]

    def pad_w(w):
        return _pad2d(w, _round_up(w.shape[0], LANE),
                      _round_up(w.shape[1], LANE)).astype(matmul_dtype)

    def pad_b(b):
        return _pad2d(b, 1, _round_up(b.shape[1], LANE))

    flat = []
    for w, b in encoder[:-1]:
        flat += [pad_w(w), pad_b(b)]
    w_last, b_last = encoder[-1]  # output width = 2 * latent -> mu | log_var
    flat += [pad_w(w_last[:, :latent]), pad_b(b_last[:, :latent]),
             pad_w(w_last[:, latent:]), pad_b(b_last[:, latent:])]
    wd0, bd0 = decoder[0]         # input rows = latent (z) then in_features (xc)
    flat += [pad_w(wd0[:latent, :]), pad_w(wd0[latent:, :]), pad_b(bd0)]
    for w, b in decoder[1:]:
        flat += [pad_w(w), pad_b(b)]
    return flat


def cvae_forward(xf, xc, eps, params, *, batch_tile=128, matmul_dtype=jnp.bfloat16):
    batch = xf.shape[0]
    in_features = params["in_features"]
    out_features = params["out_features"]
    latent = params["latent_dim"]
    n_enc = len(params["encoder"])
    n_dec = len(params["decoder"])

    d_xf = _round_up(out_features, LANE)
    d_xc = _round_up(in_features, LANE)
    d_lat = _round_up(latent, LANE)
    d_out = _round_up(out_features, LANE)

    # Batch tiling: tile of `tb` rows (multiple of 8 sublanes), batch padded to fit.
    tb = min(batch_tile, _round_up(batch, SUBLANE))
    b_pad = _round_up(batch, tb)
    n_tiles = b_pad // tb

    xf_p = _pad2d(xf, b_pad, d_xf)
    xc_p = _pad2d(xc, b_pad, d_xc)
    eps_p = _pad2d(eps, b_pad, d_lat)

    flat_w = prepare_padded_params(params, matmul_dtype)
    kernel = make_cvae_kernel(n_enc, n_dec, matmul_dtype)

    def batch_spec(feat):
        return pl.BlockSpec((tb, feat), lambda i: (i, 0))

    def const_spec(arr):
        # Full array, constant block index -> DMA'd once, resident in VMEM across tiles.
        return pl.BlockSpec(arr.shape, lambda i: (0, 0))

    in_specs = [batch_spec(d_xf), batch_spec(d_xc), batch_spec(d_lat)]
    in_specs += [const_spec(a) for a in flat_w]

    out_specs = (batch_spec(d_out), batch_spec(d_lat), batch_spec(d_lat))
    out_shape = (jax.ShapeDtypeStruct((b_pad, d_out), jnp.float32),
                 jax.ShapeDtypeStruct((b_pad, d_lat), jnp.float32),
                 jax.ShapeDtypeStruct((b_pad, d_lat), jnp.float32))

    # Advisory cost estimate for XLA scheduling around the custom call.
    flops = 2 * b_pad * sum(int(a.shape[0]) * int(a.shape[1])
                            for a in flat_w if a.shape[0] > 1)
    bytes_accessed = sum(int(a.size) * a.dtype.itemsize for a in flat_w)
    bytes_accessed += (xf_p.size + xc_p.size + eps_p.size) * 4
    bytes_accessed += b_pad * (d_out + 2 * d_lat) * 4
    cost = pl.CostEstimate(flops=flops,
                           transcendentals=b_pad * d_lat,
                           bytes_accessed=bytes_accessed)

    recon_p, mu_p, lv_p = pl.pallas_call(
        kernel,
        grid=(n_tiles,),
        in_specs=in_specs,
        out_specs=out_specs,
        out_shape=out_shape,
        compiler_params=pltpu.CompilerParams(dimension_semantics=("parallel",)),
        cost_estimate=cost,
    )(xf_p, xc_p, eps_p, *flat_w)

    return (recon_p[:batch, :out_features],
            mu_p[:batch, :latent],
            lv_p[:batch, :latent])


def cvae_reference(xf, xc, eps, params):
    """Pure-JAX f32 reference mirroring the PyTorch forward."""
    latent = params["latent_dim"]
    h = xf
    for w, b in params["encoder"][:-1]:
        h = jax.nn.relu(h @ w + b)
    w, b = params["encoder"][-1]
    x = h @ w + b
    mu, log_var = x[:, :latent], x[:, latent:]
    z = mu + eps * jnp.exp(0.5 * log_var)
    z = jnp.concatenate([z, xc], axis=1)
    for w, b in params["decoder"][:-1]:
        z = jax.nn.relu(z @ w + b)
    w, b = params["decoder"][-1]
    return z @ w + b, mu, log_var


if __name__ == "__main__":
    # Configuration:
    #   out_features (fine scale)   = 64  -> xf feature dim
    #   in_features  (coarse scale) = 32  -> xc feature dim
    #   encoder: 64 -> 48 -> 32 -> 16, latent_dim = 8
    #   decoder: (8+32)=40 -> 64 -> 80 -> 64
    batch = 8
    in_features = 32
    out_features = 64
    in_list = [64, 48, 32]
    out_list = [48, 32, 16]

    key = jax.random.PRNGKey(0)
    k_params, k_xf, k_xc, k_eps = jax.random.split(key, 4)

    params = init_params(k_params, in_features, out_features, in_list, out_list)
    latent_dim = params["latent_dim"]

    xf = jax.random.normal(k_xf, (batch, out_features), jnp.float32)
    xc = jax.random.normal(k_xc, (batch, in_features), jnp.float32)
    # eps plays the role of torch.randn_like(std); generated deterministically outside
    # the kernel (in-module RNG has no direct equivalent here).
    eps = jax.random.normal(k_eps, (batch, latent_dim), jnp.float32)

    reconstruction, mu, log_var = jax.block_until_ready(
        cvae_forward(xf, xc, eps, params)
    )

    assert reconstruction.shape == (batch, out_features)
    assert mu.shape == (batch, latent_dim)
    assert log_var.shape == (batch, latent_dim)

    # Numerical sanity check vs. pure-JAX f32 reference (bf16 MXU operands -> loose tol).
    recon_r, mu_r, lv_r = cvae_reference(xf, xc, eps, params)
    assert float(jnp.max(jnp.abs(mu - mu_r))) < 5e-2
    assert float(jnp.max(jnp.abs(log_var - lv_r))) < 5e-2
    assert float(jnp.max(jnp.abs(reconstruction - recon_r))) < 1e-1

    print("KERNEL_OK")
</pallas_src>

<mosaic_0001>
module attributes {stable_mosaic.version = 11 : i64} {
  func.func @kernel(%arg0: i32, %arg1: memref<8x128xf32, #tpu.memory_space<vmem>>, %arg2: memref<8x128xf32, #tpu.memory_space<vmem>>, %arg3: memref<8x128xf32, #tpu.memory_space<vmem>>, %arg4: memref<128x128xbf16, #tpu.memory_space<vmem>>, %arg5: memref<1x128xf32, #tpu.memory_space<vmem>>, %arg6: memref<128x128xbf16, #tpu.memory_space<vmem>>, %arg7: memref<1x128xf32, #tpu.memory_space<vmem>>, %arg8: memref<128x128xbf16, #tpu.memory_space<vmem>>, %arg9: memref<1x128xf32, #tpu.memory_space<vmem>>, %arg10: memref<128x128xbf16, #tpu.memory_space<vmem>>, %arg11: memref<1x128xf32, #tpu.memory_space<vmem>>, %arg12: memref<128x128xbf16, #tpu.memory_space<vmem>>, %arg13: memref<128x128xbf16, #tpu.memory_space<vmem>>, %arg14: memref<1x128xf32, #tpu.memory_space<vmem>>, %arg15: memref<128x128xbf16, #tpu.memory_space<vmem>>, %arg16: memref<1x128xf32, #tpu.memory_space<vmem>>, %arg17: memref<128x128xbf16, #tpu.memory_space<vmem>>, %arg18: memref<1x128xf32, #tpu.memory_space<vmem>>, %arg19: memref<8x128xf32, #tpu.memory_space<vmem>>, %arg20: memref<8x128xf32, #tpu.memory_space<vmem>>, %arg21: memref<8x128xf32, #tpu.memory_space<vmem>>) attributes {dimension_semantics = [#tpu.dimension_semantics<parallel>], iteration_bounds = array<i64: 1>, scalar_prefetch = 0 : i64, scratch_operands = 0 : i64, tpu.core_type = #tpu.core_type<tc>, window_params = [{transform_indices = @transform_0, window_bounds = array<i64: 8, 128>}, {transform_indices = @transform_1, window_bounds = array<i64: 8, 128>}, {transform_indices = @transform_2, window_bounds = array<i64: 8, 128>}, {pipeline_mode = #tpu.pipeline_mode<synchronous>, transform_indices = @transform_3, window_bounds = array<i64: 128, 128>}, {pipeline_mode = #tpu.pipeline_mode<synchronous>, transform_indices = @transform_4, window_bounds = array<i64: 1, 128>}, {pipeline_mode = #tpu.pipeline_mode<synchronous>, transform_indices = @transform_5, window_bounds = array<i64: 128, 128>}, {pipeline_mode = #tpu.pipeline_mode<synchronous>, transform_indices = @transform_6, window_bounds = array<i64: 1, 128>}, {pipeline_mode = #tpu.pipeline_mode<synchronous>, transform_indices = @transform_7, window_bounds = array<i64: 128, 128>}, {pipeline_mode = #tpu.pipeline_mode<synchronous>, transform_indices = @transform_8, window_bounds = array<i64: 1, 128>}, {pipeline_mode = #tpu.pipeline_mode<synchronous>, transform_indices = @transform_9, window_bounds = array<i64: 128, 128>}, {pipeline_mode = #tpu.pipeline_mode<synchronous>, transform_indices = @transform_10, window_bounds = array<i64: 1, 128>}, {pipeline_mode = #tpu.pipeline_mode<synchronous>, transform_indices = @transform_11, window_bounds = array<i64: 128, 128>}, {pipeline_mode = #tpu.pipeline_mode<synchronous>, transform_indices = @transform_12, window_bounds = array<i64: 128, 128>}, {pipeline_mode = #tpu.pipeline_mode<synchronous>, transform_indices = @transform_13, window_bounds = array<i64: 1, 128>}, {pipeline_mode = #tpu.pipeline_mode<synchronous>, transform_indices = @transform_14, window_bounds = array<i64: 128, 128>}, {pipeline_mode = #tpu.pipeline_mode<synchronous>, transform_indices = @transform_15, window_bounds = array<i64: 1, 128>}, {pipeline_mode = #tpu.pipeline_mode<synchronous>, transform_indices = @transform_16, window_bounds = array<i64: 128, 128>}, {pipeline_mode = #tpu.pipeline_mode<synchronous>, transform_indices = @transform_17, window_bounds = array<i64: 1, 128>}, {transform_indices = @transform_18, window_bounds = array<i64: 8, 128>}, {transform_indices = @transform_19, window_bounds = array<i64: 8, 128>}, {transform_indices = @transform_20, window_bounds = array<i64: 8, 128>}]} {
    %c0 = arith.constant 0 : index
    %c0_0 = arith.constant 0 : index
    %0 = vector.load %arg1[%c0, %c0_0] : memref<8x128xf32, #tpu.memory_space<vmem>>, vector<8x128xf32>
    %1 = arith.truncf %0 : vector<8x128xf32> to vector<8x128xbf16>
    %c0_1 = arith.constant 0 : index
    %c0_2 = arith.constant 0 : index
    %2 = vector.load %arg4[%c0_1, %c0_2] : memref<128x128xbf16, #tpu.memory_space<vmem>>, vector<128x128xbf16>
    %cst = arith.constant dense<0.000000e+00> : vector<8x128xf32>
    %3 = tpu.matmul %1, %2, %cst {dimension_numbers = #tpu.dot_dimension_numbers<[1], [0], [0], [1], [0, 0, 1, 1], [], []>} : vector<8x128xbf16>, vector<128x128xbf16>, vector<8x128xf32> -> vector<8x128xf32>
    %c0_3 = arith.constant 0 : index
    %c0_4 = arith.constant 0 : index
    %4 = vector.load %arg5[%c0_3, %c0_4] : memref<1x128xf32, #tpu.memory_space<vmem>>, vector<1x128xf32>
    %5 = vector.broadcast %4 : vector<1x128xf32> to vector<8x128xf32>
    %6 = arith.addf %3, %5 : vector<8x128xf32>
    %cst_5 = arith.constant 0.000000e+00 : f32
    %7 = vector.broadcast %cst_5 : f32 to vector<8x128xf32>
    %8 = arith.maximumf %6, %7 : vector<8x128xf32>
    %9 = arith.truncf %8 : vector<8x128xf32> to vector<8x128xbf16>
    %c0_6 = arith.constant 0 : index
    %c0_7 = arith.constant 0 : index
    %10 = vector.load %arg6[%c0_6, %c0_7] : memref<128x128xbf16, #tpu.memory_space<vmem>>, vector<128x128xbf16>
    %cst_8 = arith.constant dense<0.000000e+00> : vector<8x128xf32>
    %11 = tpu.matmul %9, %10, %cst_8 {dimension_numbers = #tpu.dot_dimension_numbers<[1], [0], [0], [1], [0, 0, 1, 1], [], []>} : vector<8x128xbf16>, vector<128x128xbf16>, vector<8x128xf32> -> vector<8x128xf32>
    %c0_9 = arith.constant 0 : index
    %c0_10 = arith.constant 0 : index
    %12 = vector.load %arg7[%c0_9, %c0_10] : memref<1x128xf32, #tpu.memory_space<vmem>>, vector<1x128xf32>
    %13 = vector.broadcast %12 : vector<1x128xf32> to vector<8x128xf32>
    %14 = arith.addf %11, %13 : vector<8x128xf32>
    %cst_11 = arith.constant 0.000000e+00 : f32
    %15 = vector.broadcast %cst_11 : f32 to vector<8x128xf32>
    %16 = arith.maximumf %14, %15 : vector<8x128xf32>
    %17 = arith.truncf %16 : vector<8x128xf32> to vector<8x128xbf16>
    %c0_12 = arith.constant 0 : index
    %c0_13 = arith.constant 0 : index
    %18 = vector.load %arg8[%c0_12, %c0_13] : memref<128x128xbf16, #tpu.memory_space<vmem>>, vector<128x128xbf16>
    %cst_14 = arith.constant dense<0.000000e+00> : vector<8x128xf32>
    %19 = tpu.matmul %17, %18, %cst_14 {dimension_numbers = #tpu.dot_dimension_numbers<[1], [0], [0], [1], [0, 0, 1, 1], [], []>} : vector<8x128xbf16>, vector<128x128xbf16>, vector<8x128xf32> -> vector<8x128xf32>
    %c0_15 = arith.constant 0 : index
    %c0_16 = arith.constant 0 : index
    %20 = vector.load %arg9[%c0_15, %c0_16] : memref<1x128xf32, #tpu.memory_space<vmem>>, vector<1x128xf32>
    %21 = vector.broadcast %20 : vector<1x128xf32> to vector<8x128xf32>
    %22 = arith.addf %19, %21 : vector<8x128xf32>
    %23 = arith.truncf %16 : vector<8x128xf32> to vector<8x128xbf16>
    %c0_17 = arith.constant 0 : index
    %c0_18 = arith.constant 0 : index
    %24 = vector.load %arg10[%c0_17, %c0_18] : memref<128x128xbf16, #tpu.memory_space<vmem>>, vector<128x128xbf16>
    %cst_19 = arith.constant dense<0.000000e+00> : vector<8x128xf32>
    %25 = tpu.matmul %23, %24, %cst_19 {dimension_numbers = #tpu.dot_dimension_numbers<[1], [0], [0], [1], [0, 0, 1, 1], [], []>} : vector<8x128xbf16>, vector<128x128xbf16>, vector<8x128xf32> -> vector<8x128xf32>
    %c0_20 = arith.constant 0 : index
    %c0_21 = arith.constant 0 : index
    %26 = vector.load %arg11[%c0_20, %c0_21] : memref<1x128xf32, #tpu.memory_space<vmem>>, vector<1x128xf32>
    %27 = vector.broadcast %26 : vector<1x128xf32> to vector<8x128xf32>
    %28 = arith.addf %25, %27 : vector<8x128xf32>
    %cst_22 = arith.constant 5.000000e-01 : f32
    %29 = vector.broadcast %cst_22 : f32 to vector<8x128xf32>
    %30 = arith.mulf %29, %28 : vector<8x128xf32>
    %31 = math.exp %30 : vector<8x128xf32>
    %c0_23 = arith.constant 0 : index
    %c0_24 = arith.constant 0 : index
    %32 = vector.load %arg3[%c0_23, %c0_24] : memref<8x128xf32, #tpu.memory_space<vmem>>, vector<8x128xf32>
    %33 = arith.mulf %32, %31 : vector<8x128xf32>
    %34 = arith.addf %22, %33 : vector<8x128xf32>
    %35 = arith.truncf %34 : vector<8x128xf32> to vector<8x128xbf16>
    %c0_25 = arith.constant 0 : index
    %c0_26 = arith.constant 0 : index
    %36 = vector.load %arg12[%c0_25, %c0_26] : memref<128x128xbf16, #tpu.memory_space<vmem>>, vector<128x128xbf16>
    %cst_27 = arith.constant dense<0.000000e+00> : vector<8x128xf32>
    %37 = tpu.matmul %35, %36, %cst_27 {dimension_numbers = #tpu.dot_dimension_numbers<[1], [0], [0], [1], [0, 0, 1, 1], [], []>} : vector<8x128xbf16>, vector<128x128xbf16>, vector<8x128xf32> -> vector<8x128xf32>
    %c0_28 = arith.constant 0 : index
    %c0_29 = arith.constant 0 : index
    %38 = vector.load %arg2[%c0_28, %c0_29] : memref<8x128xf32, #tpu.memory_space<vmem>>, vector<8x128xf32>
    %39 = arith.truncf %38 : vector<8x128xf32> to vector<8x128xbf16>
    %c0_30 = arith.constant 0 : index
    %c0_31 = arith.constant 0 : index
    %40 = vector.load %arg13[%c0_30, %c0_31] : memref<128x128xbf16, #tpu.memory_space<vmem>>, vector<128x128xbf16>
    %cst_32 = arith.constant dense<0.000000e+00> : vector<8x128xf32>
    %41 = tpu.matmul %39, %40, %cst_32 {dimension_numbers = #tpu.dot_dimension_numbers<[1], [0], [0], [1], [0, 0, 1, 1], [], []>} : vector<8x128xbf16>, vector<128x128xbf16>, vector<8x128xf32> -> vector<8x128xf32>
    %42 = arith.addf %37, %41 : vector<8x128xf32>
    %c0_33 = arith.constant 0 : index
    %c0_34 = arith.constant 0 : index
    %43 = vector.load %arg14[%c0_33, %c0_34] : memref<1x128xf32, #tpu.memory_space<vmem>>, vector<1x128xf32>
    %44 = vector.broadcast %43 : vector<1x128xf32> to vector<8x128xf32>
    %45 = arith.addf %42, %44 : vector<8x128xf32>
    %cst_35 = arith.constant 0.000000e+00 : f32
    %46 = vector.broadcast %cst_35 : f32 to vector<8x128xf32>
    %47 = arith.maximumf %45, %46 : vector<8x128xf32>
    %48 = arith.truncf %47 : vector<8x128xf32> to vector<8x128xbf16>
    %c0_36 = arith.constant 0 : index
    %c0_37 = arith.constant 0 : index
    %49 = vector.load %arg15[%c0_36, %c0_37] : memref<128x128xbf16, #tpu.memory_space<vmem>>, vector<128x128xbf16>
    %cst_38 = arith.constant dense<0.000000e+00> : vector<8x128xf32>
    %50 = tpu.matmul %48, %49, %cst_38 {dimension_numbers = #tpu.dot_dimension_numbers<[1], [0], [0], [1], [0, 0, 1, 1], [], []>} : vector<8x128xbf16>, vector<128x128xbf16>, vector<8x128xf32> -> vector<8x128xf32>
    %c0_39 = arith.constant 0 : index
    %c0_40 = arith.constant 0 : index
    %51 = vector.load %arg16[%c0_39, %c0_40] : memref<1x128xf32, #tpu.memory_space<vmem>>, vector<1x128xf32>
    %52 = vector.broadcast %51 : vector<1x128xf32> to vector<8x128xf32>
    %53 = arith.addf %50, %52 : vector<8x128xf32>
    %cst_41 = arith.constant 0.000000e+00 : f32
    %54 = vector.broadcast %cst_41 : f32 to vector<8x128xf32>
    %55 = arith.maximumf %53, %54 : vector<8x128xf32>
    %56 = arith.truncf %55 : vector<8x128xf32> to vector<8x128xbf16>
    %c0_42 = arith.constant 0 : index
    %c0_43 = arith.constant 0 : index
    %57 = vector.load %arg17[%c0_42, %c0_43] : memref<128x128xbf16, #tpu.memory_space<vmem>>, vector<128x128xbf16>
    %cst_44 = arith.constant dense<0.000000e+00> : vector<8x128xf32>
    %58 = tpu.matmul %56, %57, %cst_44 {dimension_numbers = #tpu.dot_dimension_numbers<[1], [0], [0], [1], [0, 0, 1, 1], [], []>} : vector<8x128xbf16>, vector<128x128xbf16>, vector<8x128xf32> -> vector<8x128xf32>
    %c0_45 = arith.constant 0 : index
    %c0_46 = arith.constant 0 : index
    %59 = vector.load %arg18[%c0_45, %c0_46] : memref<1x128xf32, #tpu.memory_space<vmem>>, vector<1x128xf32>
    %60 = vector.broadcast %59 : vector<1x128xf32> to vector<8x128xf32>
    %61 = arith.addf %58, %60 : vector<8x128xf32>
    %c0_47 = arith.constant 0 : index
    %c0_48 = arith.constant 0 : index
    %62 = vector.load %arg19[%c0_47, %c0_48] : memref<8x128xf32, #tpu.memory_space<vmem>>, vector<8x128xf32>
    tpu.vector_store %arg19[%c0_47, %c0_48], %61 {strides = array<i32>} : memref<8x128xf32, #tpu.memory_space<vmem>>, vector<8x128xf32>,
    %c0_49 = arith.constant 0 : index
    %c0_50 = arith.constant 0 : index
    %63 = vector.load %arg20[%c0_49, %c0_50] : memref<8x128xf32, #tpu.memory_space<vmem>>, vector<8x128xf32>
    tpu.vector_store %arg20[%c0_49, %c0_50], %22 {strides = array<i32>} : memref<8x128xf32, #tpu.memory_space<vmem>>, vector<8x128xf32>,
    %c0_51 = arith.constant 0 : index
    %c0_52 = arith.constant 0 : index
    %64 = vector.load %arg21[%c0_51, %c0_52] : memref<8x128xf32, #tpu.memory_space<vmem>>, vector<8x128xf32>
    tpu.vector_store %arg21[%c0_51, %c0_52], %28 {strides = array<i32>} : memref<8x128xf32, #tpu.memory_space<vmem>>, vector<8x128xf32>,
    return
  }
  func.func @transform_0(%arg0: i32) -> (i32, i32) {
    %c0_i32 = arith.constant 0 : i32
    %c0_i32_0 = arith.constant 0 : i32
    return %arg0, %c0_i32 : i32, i32
  }
  func.func @transform_1(%arg0: i32) -> (i32, i32) {
    %c0_i32 = arith.constant 0 : i32
    %c0_i32_0 = arith.constant 0 : i32
    return %arg0, %c0_i32 : i32, i32
  }
  func.func @transform_2(%arg0: i32) -> (i32, i32) {
    %c0_i32 = arith.constant 0 : i32
    %c0_i32_0 = arith.constant 0 : i32
    return %arg0, %c0_i32 : i32, i32
  }
  func.func @transform_3(%arg0: i32) -> (i32, i32) {
    %c0_i32 = arith.constant 0 : i32
    %c0_i32_0 = arith.constant 0 : i32
    %c0_i32_1 = arith.constant 0 : i32
    return %c0_i32, %c0_i32_0 : i32, i32
  }
  func.func @transform_4(%arg0: i32) -> (i32, i32) {
    %c0_i32 = arith.constant 0 : i32
    %c0_i32_0 = arith.constant 0 : i32
    %c0_i32_1 = arith.constant 0 : i32
    return %c0_i32, %c0_i32_0 : i32, i32
  }
  func.func @transform_5(%arg0: i32) -> (i32, i32) {
    %c0_i32 = arith.constant 0 : i32
    %c0_i32_0 = arith.constant 0 : i32
    %c0_i32_1 = arith.constant 0 : i32
    return %c0_i32, %c0_i32_0 : i32, i32
  }
  func.func @transform_6(%arg0: i32) -> (i32, i32) {
    %c0_i32 = arith.constant 0 : i32
    %c0_i32_0 = arith.constant 0 : i32
    %c0_i32_1 = arith.constant 0 : i32
    return %c0_i32, %c0_i32_0 : i32, i32
  }
  func.func @transform_7(%arg0: i32) -> (i32, i32) {
    %c0_i32 = arith.constant 0 : i32
    %c0_i32_0 = arith.constant 0 : i32
    %c0_i32_1 = arith.constant 0 : i32
    return %c0_i32, %c0_i32_0 : i32, i32
  }
  func.func @transform_8(%arg0: i32) -> (i32, i32) {
    %c0_i32 = arith.constant 0 : i32
    %c0_i32_0 = arith.constant 0 : i32
    %c0_i32_1 = arith.constant 0 : i32
    return %c0_i32, %c0_i32_0 : i32, i32
  }
  func.func @transform_9(%arg0: i32) -> (i32, i32) {
    %c0_i32 = arith.constant 0 : i32
    %c0_i32_0 = arith.constant 0 : i32
    %c0_i32_1 = arith.constant 0 : i32
    return %c0_i32, %c0_i32_0 : i32, i32
  }
  func.func @transform_10(%arg0: i32) -> (i32, i32) {
    %c0_i32 = arith.constant 0 : i32
    %c0_i32_0 = arith.constant 0 : i32
    %c0_i32_1 = arith.constant 0 : i32
    return %c0_i32, %c0_i32_0 : i32, i32
  }
  func.func @transform_11(%arg0: i32) -> (i32, i32) {
    %c0_i32 = arith.constant 0 : i32
    %c0_i32_0 = arith.constant 0 : i32
    %c0_i32_1 = arith.constant 0 : i32
    return %c0_i32, %c0_i32_0 : i32, i32
  }
  func.func @transform_12(%arg0: i32) -> (i32, i32) {
    %c0_i32 = arith.constant 0 : i32
    %c0_i32_0 = arith.constant 0 : i32
    %c0_i32_1 = arith.constant 0 : i32
    return %c0_i32, %c0_i32_0 : i32, i32
  }
  func.func @transform_13(%arg0: i32) -> (i32, i32) {
    %c0_i32 = arith.constant 0 : i32
    %c0_i32_0 = arith.constant 0 : i32
    %c0_i32_1 = arith.constant 0 : i32
    return %c0_i32, %c0_i32_0 : i32, i32
  }
  func.func @transform_14(%arg0: i32) -> (i32, i32) {
    %c0_i32 = arith.constant 0 : i32
    %c0_i32_0 = arith.constant 0 : i32
    %c0_i32_1 = arith.constant 0 : i32
    return %c0_i32, %c0_i32_0 : i32, i32
  }
  func.func @transform_15(%arg0: i32) -> (i32, i32) {
    %c0_i32 = arith.constant 0 : i32
    %c0_i32_0 = arith.constant 0 : i32
    %c0_i32_1 = arith.constant 0 : i32
    return %c0_i32, %c0_i32_0 : i32, i32
  }
  func.func @transform_16(%arg0: i32) -> (i32, i32) {
    %c0_i32 = arith.constant 0 : i32
    %c0_i32_0 = arith.constant 0 : i32
    %c0_i32_1 = arith.constant 0 : i32
    return %c0_i32, %c0_i32_0 : i32, i32
  }
  func.func @transform_17(%arg0: i32) -> (i32, i32) {
    %c0_i32 = arith.constant 0 : i32
    %c0_i32_0 = arith.constant 0 : i32
    %c0_i32_1 = arith.constant 0 : i32
    return %c0_i32, %c0_i32_0 : i32, i32
  }
  func.func @transform_18(%arg0: i32) -> (i32, i32) {
    %c0_i32 = arith.constant 0 : i32
    %c0_i32_0 = arith.constant 0 : i32
    return %arg0, %c0_i32 : i32, i32
  }
  func.func @transform_19(%arg0: i32) -> (i32, i32) {
    %c0_i32 = arith.constant 0 : i32
    %c0_i32_0 = arith.constant 0 : i32
    return %arg0, %c0_i32 : i32, i32
  }
  func.func @transform_20(%arg0: i32) -> (i32, i32) {
    %c0_i32 = arith.constant 0 : i32
    %c0_i32_0 = arith.constant 0 : i32
    return %arg0, %c0_i32 : i32, i32
  }
}

</mosaic_0001>

<llo_original>
// kernel: tpu_custom_call.1
$region0: #{tpu_custom_call.1}
  #allocation0 [shape = 'u32[]', space=smem, size = 0x4, offset = 0x4, fixed_abs, tag = 'smem constant byte address 0x4 - core index']
  #allocation1 [shape = 'u32[144,128]{1,0:T(1,128)}', space=vmem, size = 0x12000, scoped, tag = 'internal scratch']
  %s0 = inlined_call_operand.hbm [shape: f32[8,128], index: 0, kind: input, shape index: {}]
  %s1 = inlined_call_operand.hbm [shape: f32[8,128], index: 1, kind: input, shape index: {}]
  %s2 = inlined_call_operand.hbm [shape: f32[8,128], index: 2, kind: input, shape index: {}]
  %s3 = inlined_call_operand.hbm [shape: bf16[128,128], index: 3, kind: input, shape index: {}]
  %s4 = inlined_call_operand.vmem [shape: f32[1,128], index: 4, kind: input, shape index: {}]
  %s5 = inlined_call_operand.hbm [shape: bf16[128,128], index: 5, kind: input, shape index: {}]
  %s6 = inlined_call_operand.vmem [shape: f32[1,128], index: 6, kind: input, shape index: {}]
  %s7 = inlined_call_operand.hbm [shape: bf16[128,128], index: 7, kind: input, shape index: {}]
  %s8 = inlined_call_operand.vmem [shape: f32[1,128], index: 8, kind: input, shape index: {}]
  %s9 = inlined_call_operand.hbm [shape: bf16[128,128], index: 9, kind: input, shape index: {}]
  %s10 = inlined_call_operand.vmem [shape: f32[1,128], index: 10, kind: input, shape index: {}]
  %s11 = inlined_call_operand.hbm [shape: bf16[128,128], index: 11, kind: input, shape index: {}]
  %s12 = inlined_call_operand.hbm [shape: bf16[128,128], index: 12, kind: input, shape index: {}]
  %s13 = inlined_call_operand.vmem [shape: f32[1,128], index: 13, kind: input, shape index: {}]
  %s14 = inlined_call_operand.hbm [shape: bf16[128,128], index: 14, kind: input, shape index: {}]
  %s15 = inlined_call_operand.vmem [shape: f32[1,128], index: 15, kind: input, shape index: {}]
  %s16 = inlined_call_operand.hbm [shape: bf16[128,128], index: 16, kind: input, shape index: {}]
  %s17 = inlined_call_operand.vmem [shape: f32[1,128], index: 17, kind: input, shape index: {}]
  %s18 = inlined_call_operand.hbm [shape: f32[8,128], index: 18, kind: output, shape index: {0}]
  %s19 = inlined_call_operand.hbm [shape: f32[8,128], index: 19, kind: output, shape index: {1}]
  %s20 = inlined_call_operand.hbm [shape: f32[8,128], index: 20, kind: output, shape index: {2}]
  %21 = xla_tuple %s18, %s19, %s20
  %s22 = sld [smem:[#allocation0]]
  $region142: #{tpu_custom_call.1} parent=0
    _
  %s24 = ssub.s32 1, %s22
  %s25 = scalar_select 0, %s24, %s22
  $region1: #{tpu_custom_call.1} parent=0
    #allocation2 [shape = 'u8[4096]{0}', space=vmem, size = 0x1000, scoped, tag = 'input window, operand 0, single buffered']
    #allocation3 [shape = 's32[1]{0}', space=sflag, size = 0x4, scoped, tag = 'scoped memory for tpu_custom_call.1']
    #allocation4 [shape = 's32[1]{0}', space=sflag, size = 0x4, scoped, tag = 'scoped memory for tpu_custom_call.1']
    #allocation5 [shape = 'u8[4096]{0}', space=vmem, size = 0x1000, scoped, tag = 'input window, operand 1, single buffered']
    #allocation6 [shape = 's32[1]{0}', space=sflag, size = 0x4, scoped, tag = 'scoped memory for tpu_custom_call.1']
    #allocation7 [shape = 'u8[4096]{0}', space=vmem, size = 0x1000, scoped, tag = 'input window, operand 2, single buffered']
    #allocation8 [shape = 'u8[32768]{0}', space=vmem, size = 0x8000, scoped, tag = 'input window, operand 3, single buffered']
    #allocation9 [shape = 's32[1]{0}', space=sflag, size = 0x4, scoped, tag = 'scoped memory for tpu_custom_call.1']
    #allocation10 [shape = 'u8[32768]{0}', space=vmem, size = 0x8000, scoped, tag = 'input window, operand 5, single buffered']
    #allocation11 [shape = 'u8[32768]{0}', space=vmem, size = 0x8000, scoped, tag = 'input window, operand 7, single buffered']
    #allocation12 [shape = 's32[1]{0}', space=sflag, size = 0x4, scoped, tag = 'scoped memory for tpu_custom_call.1']
    #allocation13 [shape = 'u8[32768]{0}', space=vmem, size = 0x8000, scoped, tag = 'input window, operand 9, single buffered']
    #allocation14 [shape = 'u8[32768]{0}', space=vmem, size = 0x8000, scoped, tag = 'input window, operand 11, single buffered']
    #allocation15 [shape = 's32[1]{0}', space=sflag, size = 0x4, scoped, tag = 'scoped memory for tpu_custom_call.1']
    #allocation16 [shape = 'u8[32768]{0}', space=vmem, size = 0x8000, scoped, tag = 'input window, operand 12, single buffered']
    #allocation17 [shape = 'u8[32768]{0}', space=vmem, size = 0x8000, scoped, tag = 'input window, operand 14, single buffered']
    #allocation18 [shape = 's32[1]{0}', space=sflag, size = 0x4, scoped, tag = 'scoped memory for tpu_custom_call.1']
    #allocation19 [shape = 'u8[32768]{0}', space=vmem, size = 0x8000, scoped, tag = 'input window, operand 16, single buffered']
    #allocation20 [shape = 'u8[4096]{0}', space=vmem, size = 0x1000, scoped, tag = 'output window, operand 0, single buffered']
    #allocation21 [shape = 'u8[4096]{0}', space=vmem, size = 0x1000, scoped, tag = 'output window, operand 1, single buffered']
    #allocation22 [shape = 's32[1]{0}', space=sflag, size = 0x4, scoped, tag = 'scoped memory for tpu_custom_call.1']
    #allocation23 [shape = 'u8[4096]{0}', space=vmem, size = 0x1000, scoped, tag = 'output window, operand 2, single buffered']
    %26 = vsyncpa [#allocation3], 0
    %27 = vsyncpa [#allocation6], 0
    %28 = vsyncpa [#allocation9], 0
    %29 = vsyncpa [#allocation12], 0
    %30 = vsyncpa [#allocation15], 0
    %31 = vsyncpa [#allocation18], 0
    %32 = vsyncpa [#allocation4], 0
    %33 = vsyncpa [#allocation22], 0
    // Predicated region
    $region2: #{tpu_custom_call.1} parent=1 // pred_check
      _
    $region3: #{tpu_custom_call.1} parent=1 // pred_check_branch
      %35 = sbr.rel (0) target = $region5
    $region4: #{tpu_custom_call.1} parent=1 // pred_region
      %s37 = ssub.s32 128, 128
      %38 = vsyncadd [#allocation3], %s37
      %s40 = sshll.u32 [#allocation2], 4
      %s41 = int_to_ptr.vmem [resolvable:$true] %s40
      %43 = dma.hbm_to_vmem [thread:$0]  %s0, 128, %s41, [#allocation3]
    $region5: #{tpu_custom_call.1} parent=1 // pred_fallthru
      _
    // Predicated region
    $region6: #{tpu_custom_call.1} parent=1 // pred_check
      _
    $region7: #{tpu_custom_call.1} parent=1 // pred_check_branch
      %45 = sbr.rel (0) target = $region9
    $region8: #{tpu_custom_call.1} parent=1 // pred_region
      %s47 = ssub.s32 128, 128
      %48 = vsyncadd [#allocation6], %s47
      %s50 = sshll.u32 [#allocation5], 4
      %s51 = int_to_ptr.vmem [resolvable:$true] %s50
      %53 = dma.hbm_to_vmem [thread:$0]  %s1, 128, %s51, [#allocation6]
    $region9: #{tpu_custom_call.1} parent=1 // pred_fallthru
      _
    // Predicated region
    $region10: #{tpu_custom_call.1} parent=1 // pred_check
      _
    $region11: #{tpu_custom_call.1} parent=1 // pred_check_branch
      %55 = sbr.rel (0) target = $region13
    $region12: #{tpu_custom_call.1} parent=1 // pred_region
      %s57 = ssub.s32 128, 128
      %58 = vsyncadd [#allocation6], %s57
      %s60 = sshll.u32 [#allocation7], 4
      %s61 = int_to_ptr.vmem [resolvable:$true] %s60
      %63 = dma.hbm_to_vmem [thread:$0]  %s2, 128, %s61, [#allocation6]
    $region13: #{tpu_custom_call.1} parent=1 // pred_fallthru
      _
    // Predicated region
    $region14: #{tpu_custom_call.1} parent=1 // pred_check
      _
    $region15: #{tpu_custom_call.1} parent=1 // pred_check_branch
      %65 = sbr.rel (0) target = $region17
    $region16: #{tpu_custom_call.1} parent=1 // pred_region
      %s67 = ssub.s32 1024, 1024
      %68 = vsyncadd [#allocation9], %s67
      %s69 = sshll.u32 [#allocation8], 4
      %s70 = int_to_ptr.vmem [resolvable:$true] %s69
      %75 = dma.hbm_to_vmem [thread:$0]  %s3, 1024, %s70, [#allocation9], 64, 64, 4
    $region17: #{tpu_custom_call.1} parent=1 // pred_fallthru
      _
    // Predicated region
    $region18: #{tpu_custom_call.1} parent=1 // pred_check
      _
    $region19: #{tpu_custom_call.1} parent=1 // pred_check_branch
      %77 = sbr.rel (0) target = $region21
    $region20: #{tpu_custom_call.1} parent=1 // pred_region
      _
    $region21: #{tpu_custom_call.1} parent=1 // pred_fallthru
      _
    // Predicated region
    $region22: #{tpu_custom_call.1} parent=1 // pred_check
      _
    $region23: #{tpu_custom_call.1} parent=1 // pred_check_branch
      %79 = sbr.rel (0) target = $region25
    $region24: #{tpu_custom_call.1} parent=1 // pred_region
      %s81 = ssub.s32 1024, 1024
      %82 = vsyncadd [#allocation9], %s81
      %s83 = sshll.u32 [#allocation10], 4
      %s84 = int_to_ptr.vmem [resolvable:$true] %s83
      %89 = dma.hbm_to_vmem [thread:$0]  %s5, 1024, %s84, [#allocation9], 64, 64, 4
    $region25: #{tpu_custom_call.1} parent=1 // pred_fallthru
      _
    // Predicated region
    $region26: #{tpu_custom_call.1} parent=1 // pred_check
      _
    $region27: #{tpu_custom_call.1} parent=1 // pred_check_branch
      %91 = sbr.rel (0) target = $region29
    $region28: #{tpu_custom_call.1} parent=1 // pred_region
      _
    $region29: #{tpu_custom_call.1} parent=1 // pred_fallthru
      _
    // Predicated region
    $region30: #{tpu_custom_call.1} parent=1 // pred_check
      _
    $region31: #{tpu_custom_call.1} parent=1 // pred_check_branch
      %93 = sbr.rel (0) target = $region33
    $region32: #{tpu_custom_call.1} parent=1 // pred_region
      %s95 = ssub.s32 1024, 1024
      %96 = vsyncadd [#allocation12], %s95
      %s97 = sshll.u32 [#allocation11], 4
      %s98 = int_to_ptr.vmem [resolvable:$true] %s97
      %103 = dma.hbm_to_vmem [thread:$0]  %s7, 1024, %s98, [#allocation12], 64, 64, 4
    $region33: #{tpu_custom_call.1} parent=1 // pred_fallthru
      _
    // Predicated region
    $region34: #{tpu_custom_call.1} parent=1 // pred_check
      _
    $region35: #{tpu_custom_call.1} parent=1 // pred_check_branch
      %105 = sbr.rel (0) target = $region37
    $region36: #{tpu_custom_call.1} parent=1 // pred_region
      _
    $region37: #{tpu_custom_call.1} parent=1 // pred_fallthru
      _
    // Predicated region
    $region38: #{tpu_custom_call.1} parent=1 // pred_check
      _
    $region39: #{tpu_custom_call.1} parent=1 // pred_check_branch
      %107 = sbr.rel (0) target = $region41
    $region40: #{tpu_custom_call.1} parent=1 // pred_region
      %s109 = ssub.s32 1024, 1024
      %110 = vsyncadd [#allocation12], %s109
      %s111 = sshll.u32 [#allocation13], 4
      %s112 = int_to_ptr.vmem [resolvable:$true] %s111
      %117 = dma.hbm_to_vmem [thread:$0]  %s9, 1024, %s112, [#allocation12], 64, 64, 4
    $region41: #{tpu_custom_call.1} parent=1 // pred_fallthru
      _
    // Predicated region
    $region42: #{tpu_custom_call.1} parent=1 // pred_check
      _
    $region43: #{tpu_custom_call.1} parent=1 // pred_check_branch
      %119 = sbr.rel (0) target = $region45
    $region44: #{tpu_custom_call.1} parent=1 // pred_region
      _
    $region45: #{tpu_custom_call.1} parent=1 // pred_fallthru
      _
    // Predicated region
    $region46: #{tpu_custom_call.1} parent=1 // pred_check
      _
    $region47: #{tpu_custom_call.1} parent=1 // pred_check_branch
      %121 = sbr.rel (0) target = $region49
    $region48: #{tpu_custom_call.1} parent=1 // pred_region
      %s123 = ssub.s32 1024, 1024
      %124 = vsyncadd [#allocation15], %s123
      %s125 = sshll.u32 [#allocation14], 4
      %s126 = int_to_ptr.vmem [resolvable:$true] %s125
      %131 = dma.hbm_to_vmem [thread:$0]  %s11, 1024, %s126, [#allocation15], 64, 64, 4
    $region49: #{tpu_custom_call.1} parent=1 // pred_fallthru
      _
    // Predicated region
    $region50: #{tpu_custom_call.1} parent=1 // pred_check
      _
    $region51: #{tpu_custom_call.1} parent=1 // pred_check_branch
      %133 = sbr.rel (0) target = $region53
    $region52: #{tpu_custom_call.1} parent=1 // pred_region
      %s135 = ssub.s32 1024, 1024
      %136 = vsyncadd [#allocation15], %s135
      %s137 = sshll.u32 [#allocation16], 4
      %s138 = int_to_ptr.vmem [resolvable:$true] %s137
      %143 = dma.hbm_to_vmem [thread:$0]  %s12, 1024, %s138, [#allocation15], 64, 64, 4
    $region53: #{tpu_custom_call.1} parent=1 // pred_fallthru
      _
    // Predicated region
    $region54: #{tpu_custom_call.1} parent=1 // pred_check
      _
    $region55: #{tpu_custom_call.1} parent=1 // pred_check_branch
      %145 = sbr.rel (0) target = $region57
    $region56: #{tpu_custom_call.1} parent=1 // pred_region
      _
    $region57: #{tpu_custom_call.1} parent=1 // pred_fallthru
      _
    // Predicated region
    $region58: #{tpu_custom_call.1} parent=1 // pred_check
      _
    $region59: #{tpu_custom_call.1} parent=1 // pred_check_branch
      %147 = sbr.rel (0) target = $region61
    $region60: #{tpu_custom_call.1} parent=1 // pred_region
      %s149 = ssub.s32 1024, 1024
      %150 = vsyncadd [#allocation18], %s149
      %s151 = sshll.u32 [#allocation17], 4
      %s152 = int_to_ptr.vmem [resolvable:$true] %s151
      %157 = dma.hbm_to_vmem [thread:$0]  %s14, 1024, %s152, [#allocation18], 64, 64, 4
    $region61: #{tpu_custom_call.1} parent=1 // pred_fallthru
      _
    // Predicated region
    $region62: #{tpu_custom_call.1} parent=1 // pred_check
      _
    $region63: #{tpu_custom_call.1} parent=1 // pred_check_branch
      %159 = sbr.rel (0) target = $region65
    $region64: #{tpu_custom_call.1} parent=1 // pred_region
      _
    $region65: #{tpu_custom_call.1} parent=1 // pred_fallthru
      _
    // Predicated region
    $region66: #{tpu_custom_call.1} parent=1 // pred_check
      _
    $region67: #{tpu_custom_call.1} parent=1 // pred_check_branch
      %161 = sbr.rel (0) target = $region69
    $region68: #{tpu_custom_call.1} parent=1 // pred_region
      %s163 = ssub.s32 1024, 1024
      %164 = vsyncadd [#allocation18], %s163
      %s165 = sshll.u32 [#allocation19], 4
      %s166 = int_to_ptr.vmem [resolvable:$true] %s165
      %171 = dma.hbm_to_vmem [thread:$0]  %s16, 1024, %s166, [#allocation18], 64, 64, 4
    $region69: #{tpu_custom_call.1} parent=1 // pred_fallthru
      _
    // Predicated region
    $region70: #{tpu_custom_call.1} parent=1 // pred_check
      _
    $region71: #{tpu_custom_call.1} parent=1 // pred_check_branch
      %173 = sbr.rel (0) target = $region73
    $region72: #{tpu_custom_call.1} parent=1 // pred_region
      _
    $region73: #{tpu_custom_call.1} parent=1 // pred_fallthru
      _
    // Predicated region
    $region74: #{tpu_custom_call.1} parent=1 // pred_check
      _
    $region75: #{tpu_custom_call.1} parent=1 // pred_check_branch
      %175 = sbr.rel (0) target = $region77
    $region76: #{tpu_custom_call.1} parent=1 // pred_region
      %176 = dma.done [#allocation3], 128
    $region77: #{tpu_custom_call.1} parent=1 // pred_fallthru
      _
    // Predicated region
    $region78: #{tpu_custom_call.1} parent=1 // pred_check
      _
    $region79: #{tpu_custom_call.1} parent=1 // pred_check_branch
      %178 = sbr.rel (0) target = $region81
    $region80: #{tpu_custom_call.1} parent=1 // pred_region
      %179 = dma.done [#allocation6], 128
    $region81: #{tpu_custom_call.1} parent=1 // pred_fallthru
      _
    // Predicated region
    $region82: #{tpu_custom_call.1} parent=1 // pred_check
      _
    $region83: #{tpu_custom_call.1} parent=1 // pred_check_branch
      %181 = sbr.rel (0) target = $region85
    $region84: #{tpu_custom_call.1} parent=1 // pred_region
      %182 = dma.done [#allocation6], 128
    $region85: #{tpu_custom_call.1} parent=1 // pred_fallthru
      _
    // Predicated region
    $region86: #{tpu_custom_call.1} parent=1 // pred_check
      _
    $region87: #{tpu_custom_call.1} parent=1 // pred_check_branch
      %184 = sbr.rel (0) target = $region89
    $region88: #{tpu_custom_call.1} parent=1 // pred_region
      %185 = dma.done [#allocation9], 1024
    $region89: #{tpu_custom_call.1} parent=1 // pred_fallthru
      _
    // Predicated region
    $region90: #{tpu_custom_call.1} parent=1 // pred_check
      _
    $region91: #{tpu_custom_call.1} parent=1 // pred_check_branch
      %187 = sbr.rel (0) target = $region93
    $region92: #{tpu_custom_call.1} parent=1 // pred_region
      %188 = dma.done [#allocation9], 1024
    $region93: #{tpu_custom_call.1} parent=1 // pred_fallthru
      _
    // Predicated region
    $region94: #{tpu_custom_call.1} parent=1 // pred_check
      _
    $region95: #{tpu_custom_call.1} parent=1 // pred_check_branch
      %190 = sbr.rel (0) target = $region97
    $region96: #{tpu_custom_call.1} parent=1 // pred_region
      %191 = dma.done [#allocation12], 1024
    $region97: #{tpu_custom_call.1} parent=1 // pred_fallthru
      _
    // Predicated region
    $region98: #{tpu_custom_call.1} parent=1 // pred_check
      _
    $region99: #{tpu_custom_call.1} parent=1 // pred_check_branch
      %193 = sbr.rel (0) target = $region101
    $region100: #{tpu_custom_call.1} parent=1 // pred_region
      %194 = dma.done [#allocation12], 1024
    $region101: #{tpu_custom_call.1} parent=1 // pred_fallthru
      _
    // Predicated region
    $region102: #{tpu_custom_call.1} parent=1 // pred_check
      _
    $region103: #{tpu_custom_call.1} parent=1 // pred_check_branch
      %196 = sbr.rel (0) target = $region105
    $region104: #{tpu_custom_call.1} parent=1 // pred_region
      %197 = dma.done [#allocation15], 1024
    $region105: #{tpu_custom_call.1} parent=1 // pred_fallthru
      _
    // Predicated region
    $region106: #{tpu_custom_call.1} parent=1 // pred_check
      _
    $region107: #{tpu_custom_call.1} parent=1 // pred_check_branch
      %199 = sbr.rel (0) target = $region109
    $region108: #{tpu_custom_call.1} parent=1 // pred_region
      %200 = dma.done [#allocation15], 1024
    $region109: #{tpu_custom_call.1} parent=1 // pred_fallthru
      _
    // Predicated region
    $region110: #{tpu_custom_call.1} parent=1 // pred_check
      _
    $region111: #{tpu_custom_call.1} parent=1 // pred_check_branch
      %202 = sbr.rel (0) target = $region113
    $region112: #{tpu_custom_call.1} parent=1 // pred_region
      %203 = dma.done [#allocation18], 1024
    $region113: #{tpu_custom_call.1} parent=1 // pred_fallthru
      _
    // Predicated region
    $region114: #{tpu_custom_call.1} parent=1 // pred_check
      _
    $region115: #{tpu_custom_call.1} parent=1 // pred_check_branch
      %205 = sbr.rel (0) target = $region117
    $region116: #{tpu_custom_call.1} parent=1 // pred_region
      %206 = dma.done [#allocation18], 1024
    $region117: #{tpu_custom_call.1} parent=1 // pred_fallthru
      _
    %v208 = vld [vmem:[#allocation2] sm:$0xff]
    %v209 = vpack.c.bf16 %v208, %v208
    %v210 = vld [vmem:[#allocation8] sm:$0xf]
    %v211 = vld [vmem:[#allocation8 + $0x4] sm:$0xf]
    %v212 = vld [vmem:[#allocation8 + $0x8] sm:$0xf]
    %v213 = vld [vmem:[#allocation8 + $0xc] sm:$0xf]
    %v214 = vld [vmem:[#allocation8 + $0x10] sm:$0xf]
    %v215 = vld [vmem:[#allocation8 + $0x14] sm:$0xf]
    %v216 = vld [vmem:[#allocation8 + $0x18] sm:$0xf]
    %v217 = vld [vmem:[#allocation8 + $0x1c] sm:$0xf]
    %v218 = vld [vmem:[#allocation8 + $0x20] sm:$0xf]
    %v219 = vld [vmem:[#allocation8 + $0x24] sm:$0xf]
    %v220 = vld [vmem:[#allocation8 + $0x28] sm:$0xf]
    %v221 = vld [vmem:[#allocation8 + $0x2c] sm:$0xf]
    %v222 = vld [vmem:[#allocation8 + $0x30] sm:$0xf]
    %v223 = vld [vmem:[#allocation8 + $0x34] sm:$0xf]
    %v224 = vld [vmem:[#allocation8 + $0x38] sm:$0xf]
    %v225 = vld [vmem:[#allocation8 + $0x3c] sm:$0xf]
    %v226 = vld [vmem:[%s4] sm:$0x1]
    %v228 = vlaneseq
    %v229 = vshrl.u32 %v228, 7
    %v230 = vsub.s32 0, %v229
    %v231 = vrot.slane %v226, %v230
    %v249 = vunpack.c.l.b16 %v210
    %v250 = vunpack.c.l.b16 %v211
    %v251 = vunpack.c.l.b16 %v212
    %v252 = vunpack.c.l.b16 %v213
    %v253 = vunpack.c.l.b16 %v214
    %v254 = vunpack.c.l.b16 %v215
    %v255 = vunpack.c.l.b16 %v216
    %v256 = vunpack.c.l.b16 %v217
    %v257 = vunpack.c.l.b16 %v218
    %v258 = vunpack.c.l.b16 %v219
    %v259 = vunpack.c.l.b16 %v220
    %v260 = vunpack.c.l.b16 %v221
    %v261 = vunpack.c.l.b16 %v222
    %v262 = vunpack.c.l.b16 %v223
    %v263 = vunpack.c.l.b16 %v224
    %v264 = vunpack.c.l.b16 %v225
    %v265 = vpack.c.b16 %v250, %v249
    %v266 = vpack.c.b16 %v252, %v251
    %v267 = vpack.c.b16 %v254, %v253
    %v268 = vpack.c.b16 %v256, %v255
    %v269 = vpack.c.b16 %v258, %v257
    %v270 = vpack.c.b16 %v260, %v259
    %v271 = vpack.c.b16 %v262, %v261
    %v272 = vpack.c.b16 %v264, %v263
    %281 = vmatprep.subr.bf16.mxu0 0
    %282 = vmatpush1.bf16.msra.mxu0 %v265
    %283 = vmatprep.subr.bf16.mxu0 0
    %284 = vmatpush1.bf16.msra.mxu0 %v266
    %285 = vmatprep.subr.bf16.mxu0 0
    %286 = vmatpush1.bf16.msra.mxu0 %v267
    %287 = vmatprep.subr.bf16.mxu0 0
    %288 = vmatpush1.bf16.msra.mxu0 %v268
    %289 = vmatprep.subr.bf16.mxu0 0
    %290 = vmatpush1.bf16.msra.mxu0 %v269
    %291 = vmatprep.subr.bf16.mxu0 0
    %292 = vmatpush1.bf16.msra.mxu0 %v270
    %293 = vmatprep.subr.bf16.mxu0 0
    %294 = vmatpush1.bf16.msra.mxu0 %v271
    %295 = vmatprep.subr.bf16.mxu0 0
    %296 = vmatpush1.bf16.msra.mxu0 %v272
    %297 = vmatprep.subr.bf16.mxu0 0
    %298 = vmatpush1.bf16.msra.mxu0 0
    %299 = vmatprep.subr.bf16.mxu0 0
    %300 = vmatpush1.bf16.msra.mxu0 0
    %301 = vmatprep.subr.bf16.mxu0 0
    %302 = vmatpush1.bf16.msra.mxu0 0
    %303 = vmatprep.subr.bf16.mxu0 0
    %304 = vmatpush1.bf16.msra.mxu0 0
    %305 = vmatprep.subr.bf16.mxu0 0
    %306 = vmatpush1.bf16.msra.mxu0 0
    %307 = vmatprep.subr.bf16.mxu0 0
    %308 = vmatpush1.bf16.msra.mxu0 0
    %309 = vmatprep.subr.bf16.mxu0 0
    %310 = vmatpush1.bf16.msra.mxu0 0
    %311 = vmatprep.subr.bf16.mxu0 0
    %312 = vmatpush1.bf16.msra.mxu0 0
    %313 = vmatprep.mubr.bf16.mxu0 0
    %314 = vmatmul.mubr.bf16.gmra.mrb[0].mxu0 %v209
    %v315 = vpop.f32.mrb[0].mxu0
    %v316 = vadd.f32 %v231, %v315
    %v317 = vpop.f32.mrb[0].mxu0
    %v318 = vpop.f32.mrb[0].mxu0
    %v319 = vpop.f32.mrb[0].mxu0
    %320 = vdwg.mxu0
    %v321 = vmax.f32 %v316, 0.0
    %v322 = vpack.c.bf16 %v321, %v321
    %v323 = vld [vmem:[#allocation10] sm:$0xf]
    %v324 = vld [vmem:[#allocation10 + $0x4] sm:$0xf]
    %v325 = vld [vmem:[#allocation10 + $0x8] sm:$0xf]
    %v326 = vld [vmem:[#allocation10 + $0xc] sm:$0xf]
    %v327 = vld [vmem:[#allocation10 + $0x10] sm:$0xf]
    %v328 = vld [vmem:[#allocation10 + $0x14] sm:$0xf]
    %v329 = vld [vmem:[#allocation10 + $0x18] sm:$0xf]
    %v330 = vld [vmem:[#allocation10 + $0x1c] sm:$0xf]
    %v331 = vld [vmem:[#allocation10 + $0x20] sm:$0xf]
    %v332 = vld [vmem:[#allocation10 + $0x24] sm:$0xf]
    %v333 = vld [vmem:[#allocation10 + $0x28] sm:$0xf]
    %v334 = vld [vmem:[#allocation10 + $0x2c] sm:$0xf]
    %v335 = vld [vmem:[#allocation10 + $0x30] sm:$0xf]
    %v336 = vld [vmem:[#allocation10 + $0x34] sm:$0xf]
    %v337 = vld [vmem:[#allocation10 + $0x38] sm:$0xf]
    %v338 = vld [vmem:[#allocation10 + $0x3c] sm:$0xf]
    %v339 = vld [vmem:[%s6] sm:$0x1]
    %v341 = vlaneseq
    %v342 = vshrl.u32 %v341, 7
    %v343 = vsub.s32 0, %v342
    %v344 = vrot.slane %v339, %v343
    %v362 = vunpack.c.l.b16 %v323
    %v363 = vunpack.c.l.b16 %v324
    %v364 = vunpack.c.l.b16 %v325
    %v365 = vunpack.c.l.b16 %v326
    %v366 = vunpack.c.l.b16 %v327
    %v367 = vunpack.c.l.b16 %v328
    %v368 = vunpack.c.l.b16 %v329
    %v369 = vunpack.c.l.b16 %v330
    %v370 = vunpack.c.l.b16 %v331
    %v371 = vunpack.c.l.b16 %v332
    %v372 = vunpack.c.l.b16 %v333
    %v373 = vunpack.c.l.b16 %v334
    %v374 = vunpack.c.l.b16 %v335
    %v375 = vunpack.c.l.b16 %v336
    %v376 = vunpack.c.l.b16 %v337
    %v377 = vunpack.c.l.b16 %v338
    %v378 = vpack.c.b16 %v363, %v362
    %v379 = vpack.c.b16 %v365, %v364
    %v380 = vpack.c.b16 %v367, %v366
    %v381 = vpack.c.b16 %v369, %v368
    %v382 = vpack.c.b16 %v371, %v370
    %v383 = vpack.c.b16 %v373, %v372
    %v384 = vpack.c.b16 %v375, %v374
    %v385 = vpack.c.b16 %v377, %v376
    %394 = vmatprep.subr.bf16.mxu0 0
    %395 = vmatpush1.bf16.msra.mxu0 %v378
    %396 = vmatprep.subr.bf16.mxu0 0
    %397 = vmatpush1.bf16.msra.mxu0 %v379
    %398 = vmatprep.subr.bf16.mxu0 0
    %399 = vmatpush1.bf16.msra.mxu0 %v380
    %400 = vmatprep.subr.bf16.mxu0 0
    %401 = vmatpush1.bf16.msra.mxu0 %v381
    %402 = vmatprep.subr.bf16.mxu0 0
    %403 = vmatpush1.bf16.msra.mxu0 %v382
    %404 = vmatprep.subr.bf16.mxu0 0
    %405 = vmatpush1.bf16.msra.mxu0 %v383
    %406 = vmatprep.subr.bf16.mxu0 0
    %407 = vmatpush1.bf16.msra.mxu0 %v384
    %408 = vmatprep.subr.bf16.mxu0 0
    %409 = vmatpush1.bf16.msra.mxu0 %v385
    %410 = vmatprep.subr.bf16.mxu0 0
    %411 = vmatpush1.bf16.msra.mxu0 0
    %412 = vmatprep.subr.bf16.mxu0 0
    %413 = vmatpush1.bf16.msra.mxu0 0
    %414 = vmatprep.subr.bf16.mxu0 0
    %415 = vmatpush1.bf16.msra.mxu0 0
    %416 = vmatprep.subr.bf16.mxu0 0
    %417 = vmatpush1.bf16.msra.mxu0 0
    %418 = vmatprep.subr.bf16.mxu0 0
    %419 = vmatpush1.bf16.msra.mxu0 0
    %420 = vmatprep.subr.bf16.mxu0 0
    %421 = vmatpush1.bf16.msra.mxu0 0
    %422 = vmatprep.subr.bf16.mxu0 0
    %423 = vmatpush1.bf16.msra.mxu0 0
    %424 = vmatprep.subr.bf16.mxu0 0
    %425 = vmatpush1.bf16.msra.mxu0 0
    %426 = vmatprep.mubr.bf16.mxu0 0
    %427 = vmatmul.mubr.bf16.gmra.mrb[0].mxu0 %v322
    %v428 = vpop.f32.mrb[0].mxu0
    %v429 = vadd.f32 %v344, %v428
    %v430 = vpop.f32.mrb[0].mxu0
    %v431 = vpop.f32.mrb[0].mxu0
    %v432 = vpop.f32.mrb[0].mxu0
    %433 = vdwg.mxu0
    %v434 = vmax.f32 %v429, 0.0
    %v435 = vpack.c.bf16 %v434, %v434
    %v436 = vld [vmem:[#allocation11] sm:$0xf]
    %v437 = vld [vmem:[#allocation11 + $0x4] sm:$0xf]
    %v438 = vld [vmem:[#allocation11 + $0x8] sm:$0xf]
    %v439 = vld [vmem:[#allocation11 + $0xc] sm:$0xf]
    %v440 = vld [vmem:[#allocation11 + $0x10] sm:$0xf]
    %v441 = vld [vmem:[#allocation11 + $0x14] sm:$0xf]
    %v442 = vld [vmem:[#allocation11 + $0x18] sm:$0xf]
    %v443 = vld [vmem:[#allocation11 + $0x1c] sm:$0xf]
    %v444 = vld [vmem:[#allocation11 + $0x20] sm:$0xf]
    %v445 = vld [vmem:[#allocation11 + $0x24] sm:$0xf]
    %v446 = vld [vmem:[#allocation11 + $0x28] sm:$0xf]
    %v447 = vld [vmem:[#allocation11 + $0x2c] sm:$0xf]
    %v448 = vld [vmem:[#allocation11 + $0x30] sm:$0xf]
    %v449 = vld [vmem:[#allocation11 + $0x34] sm:$0xf]
    %v450 = vld [vmem:[#allocation11 + $0x38] sm:$0xf]
    %v451 = vld [vmem:[#allocation11 + $0x3c] sm:$0xf]
    %v452 = vld [vmem:[%s8] sm:$0x1]
    %v454 = vlaneseq
    %v455 = vshrl.u32 %v454, 7
    %v456 = vsub.s32 0, %v455
    %v457 = vrot.slane %v452, %v456
    %v475 = vunpack.c.l.b16 %v436
    %v476 = vunpack.c.l.b16 %v437
    %v477 = vunpack.c.l.b16 %v438
    %v478 = vunpack.c.l.b16 %v439
    %v479 = vunpack.c.l.b16 %v440
    %v480 = vunpack.c.l.b16 %v441
    %v481 = vunpack.c.l.b16 %v442
    %v482 = vunpack.c.l.b16 %v443
    %v483 = vunpack.c.l.b16 %v444
    %v484 = vunpack.c.l.b16 %v445
    %v485 = vunpack.c.l.b16 %v446
    %v486 = vunpack.c.l.b16 %v447
    %v487 = vunpack.c.l.b16 %v448
    %v488 = vunpack.c.l.b16 %v449
    %v489 = vunpack.c.l.b16 %v450
    %v490 = vunpack.c.l.b16 %v451
    %v491 = vpack.c.b16 %v476, %v475
    %v492 = vpack.c.b16 %v478, %v477
    %v493 = vpack.c.b16 %v480, %v479
    %v494 = vpack.c.b16 %v482, %v481
    %v495 = vpack.c.b16 %v484, %v483
    %v496 = vpack.c.b16 %v486, %v485
    %v497 = vpack.c.b16 %v488, %v487
    %v498 = vpack.c.b16 %v490, %v489
    %507 = vmatprep.subr.bf16.mxu0 0
    %508 = vmatpush1.bf16.msra.mxu0 %v491
    %509 = vmatprep.subr.bf16.mxu0 0
    %510 = vmatpush1.bf16.msra.mxu0 %v492
    %511 = vmatprep.subr.bf16.mxu0 0
    %512 = vmatpush1.bf16.msra.mxu0 %v493
    %513 = vmatprep.subr.bf16.mxu0 0
    %514 = vmatpush1.bf16.msra.mxu0 %v494
    %515 = vmatprep.subr.bf16.mxu0 0
    %516 = vmatpush1.bf16.msra.mxu0 %v495
    %517 = vmatprep.subr.bf16.mxu0 0
    %518 = vmatpush1.bf16.msra.mxu0 %v496
    %519 = vmatprep.subr.bf16.mxu0 0
    %520 = vmatpush1.bf16.msra.mxu0 %v497
    %521 = vmatprep.subr.bf16.mxu0 0
    %522 = vmatpush1.bf16.msra.mxu0 %v498
    %523 = vmatprep.subr.bf16.mxu0 0
    %524 = vmatpush1.bf16.msra.mxu0 0
    %525 = vmatprep.subr.bf16.mxu0 0
    %526 = vmatpush1.bf16.msra.mxu0 0
    %527 = vmatprep.subr.bf16.mxu0 0
    %528 = vmatpush1.bf16.msra.mxu0 0
    %529 = vmatprep.subr.bf16.mxu0 0
    %530 = vmatpush1.bf16.msra.mxu0 0
    %531 = vmatprep.subr.bf16.mxu0 0
    %532 = vmatpush1.bf16.msra.mxu0 0
    %533 = vmatprep.subr.bf16.mxu0 0
    %534 = vmatpush1.bf16.msra.mxu0 0
    %535 = vmatprep.subr.bf16.mxu0 0
    %536 = vmatpush1.bf16.msra.mxu0 0
    %537 = vmatprep.subr.bf16.mxu0 0
    %538 = vmatpush1.bf16.msra.mxu0 0
    %539 = vmatprep.mubr.bf16.mxu0 0
    %540 = vmatmul.mubr.bf16.gmra.mrb[0].mxu0 %v435
    %v541 = vpop.f32.mrb[0].mxu0
    %v542 = vadd.f32 %v457, %v541
    %v543 = vpop.f32.mrb[0].mxu0
    %v544 = vpop.f32.mrb[0].mxu0
    %v545 = vpop.f32.mrb[0].mxu0
    %546 = vdwg.mxu0
    %v547 = vld [vmem:[#allocation13] sm:$0xf]
    %v548 = vld [vmem:[#allocation13 + $0x4] sm:$0xf]
    %v549 = vld [vmem:[#allocation13 + $0x8] sm:$0xf]
    %v550 = vld [vmem:[#allocation13 + $0xc] sm:$0xf]
    %v551 = vld [vmem:[#allocation13 + $0x10] sm:$0xf]
    %v552 = vld [vmem:[#allocation13 + $0x14] sm:$0xf]
    %v553 = vld [vmem:[#allocation13 + $0x18] sm:$0xf]
    %v554 = vld [vmem:[#allocation13 + $0x1c] sm:$0xf]
    %v555 = vld [vmem:[#allocation13 + $0x20] sm:$0xf]
    %v556 = vld [vmem:[#allocation13 + $0x24] sm:$0xf]
    %v557 = vld [vmem:[#allocation13 + $0x28] sm:$0xf]
    %v558 = vld [vmem:[#allocation13 + $0x2c] sm:$0xf]
    %v559 = vld [vmem:[#allocation13 + $0x30] sm:$0xf]
    %v560 = vld [vmem:[#allocation13 + $0x34] sm:$0xf]
    %v561 = vld [vmem:[#allocation13 + $0x38] sm:$0xf]
    %v562 = vld [vmem:[#allocation13 + $0x3c] sm:$0xf]
    %v563 = vld [vmem:[%s10] sm:$0x1]
    %v565 = vlaneseq
    %v566 = vshrl.u32 %v565, 7
    %v567 = vsub.s32 0, %v566
    %v568 = vrot.slane %v563, %v567
    %v586 = vunpack.c.l.b16 %v547
    %v587 = vunpack.c.l.b16 %v548
    %v588 = vunpack.c.l.b16 %v549
    %v589 = vunpack.c.l.b16 %v550
    %v590 = vunpack.c.l.b16 %v551
    %v591 = vunpack.c.l.b16 %v552
    %v592 = vunpack.c.l.b16 %v553
    %v593 = vunpack.c.l.b16 %v554
    %v594 = vunpack.c.l.b16 %v555
    %v595 = vunpack.c.l.b16 %v556
    %v596 = vunpack.c.l.b16 %v557
    %v597 = vunpack.c.l.b16 %v558
    %v598 = vunpack.c.l.b16 %v559
    %v599 = vunpack.c.l.b16 %v560
    %v600 = vunpack.c.l.b16 %v561
    %v601 = vunpack.c.l.b16 %v562
    %v602 = vpack.c.b16 %v587, %v586
    %v603 = vpack.c.b16 %v589, %v588
    %v604 = vpack.c.b16 %v591, %v590
    %v605 = vpack.c.b16 %v593, %v592
    %v606 = vpack.c.b16 %v595, %v594
    %v607 = vpack.c.b16 %v597, %v596
    %v608 = vpack.c.b16 %v599, %v598
    %v609 = vpack.c.b16 %v601, %v600
    %618 = vmatprep.subr.bf16.mxu0 0
    %619 = vmatpush1.bf16.msra.mxu0 %v602
    %620 = vmatprep.subr.bf16.mxu0 0
    %621 = vmatpush1.bf16.msra.mxu0 %v603
    %622 = vmatprep.subr.bf16.mxu0 0
    %623 = vmatpush1.bf16.msra.mxu0 %v604
    %624 = vmatprep.subr.bf16.mxu0 0
    %625 = vmatpush1.bf16.msra.mxu0 %v605
    %626 = vmatprep.subr.bf16.mxu0 0
    %627 = vmatpush1.bf16.msra.mxu0 %v606
    %628 = vmatprep.subr.bf16.mxu0 0
    %629 = vmatpush1.bf16.msra.mxu0 %v607
    %630 = vmatprep.subr.bf16.mxu0 0
    %631 = vmatpush1.bf16.msra.mxu0 %v608
    %632 = vmatprep.subr.bf16.mxu0 0
    %633 = vmatpush1.bf16.msra.mxu0 %v609
    %634 = vmatprep.subr.bf16.mxu0 0
    %635 = vmatpush1.bf16.msra.mxu0 0
    %636 = vmatprep.subr.bf16.mxu0 0
    %637 = vmatpush1.bf16.msra.mxu0 0
    %638 = vmatprep.subr.bf16.mxu0 0
    %639 = vmatpush1.bf16.msra.mxu0 0
    %640 = vmatprep.subr.bf16.mxu0 0
    %641 = vmatpush1.bf16.msra.mxu0 0
    %642 = vmatprep.subr.bf16.mxu0 0
    %643 = vmatpush1.bf16.msra.mxu0 0
    %644 = vmatprep.subr.bf16.mxu0 0
    %645 = vmatpush1.bf16.msra.mxu0 0
    %646 = vmatprep.subr.bf16.mxu0 0
    %647 = vmatpush1.bf16.msra.mxu0 0
    %648 = vmatprep.subr.bf16.mxu0 0
    %649 = vmatpush1.bf16.msra.mxu0 0
    %650 = vmatprep.mubr.bf16.mxu0 0
    %651 = vmatmul.mubr.bf16.gmra.mrb[0].mxu0 %v435
    %v652 = vpop.f32.mrb[0].mxu0
    %v653 = vadd.f32 %v568, %v652
    %v654 = vpop.f32.mrb[0].mxu0
    %v655 = vpop.f32.mrb[0].mxu0
    %v656 = vpop.f32.mrb[0].mxu0
    %657 = vdwg.mxu0
    %v658 = vmul.f32 %v653, 0.5
    %v659 = vmul.f32 %v658, 1.442695
    %v660 = vpow.pop %v659
    %v661 = vld [vmem:[#allocation7] sm:$0xff]
    %v662 = vmul.f32 %v661, %v660
    %v663 = vadd.f32 %v542, %v662
    %v664 = vpack.c.bf16 %v663, %v663
    %v665 = vld [vmem:[#allocation14] sm:$0xf]
    %v666 = vld [vmem:[#allocation14 + $0x4] sm:$0xf]
    %v667 = vld [vmem:[#allocation14 + $0x8] sm:$0xf]
    %v668 = vld [vmem:[#allocation14 + $0xc] sm:$0xf]
    %v669 = vld [vmem:[#allocation14 + $0x10] sm:$0xf]
    %v670 = vld [vmem:[#allocation14 + $0x14] sm:$0xf]
    %v671 = vld [vmem:[#allocation14 + $0x18] sm:$0xf]
    %v672 = vld [vmem:[#allocation14 + $0x1c] sm:$0xf]
    %v673 = vld [vmem:[#allocation14 + $0x20] sm:$0xf]
    %v674 = vld [vmem:[#allocation14 + $0x24] sm:$0xf]
    %v675 = vld [vmem:[#allocation14 + $0x28] sm:$0xf]
    %v676 = vld [vmem:[#allocation14 + $0x2c] sm:$0xf]
    %v677 = vld [vmem:[#allocation14 + $0x30] sm:$0xf]
    %v678 = vld [vmem:[#allocation14 + $0x34] sm:$0xf]
    %v679 = vld [vmem:[#allocation14 + $0x38] sm:$0xf]
    %v680 = vld [vmem:[#allocation14 + $0x3c] sm:$0xf]
    %v681 = vld [vmem:[#allocation5] sm:$0xff]
    %v682 = vpack.c.bf16 %v681, %v681
    %v683 = vld [vmem:[#allocation16] sm:$0xf]
    %v684 = vld [vmem:[#allocation16 + $0x4] sm:$0xf]
    %v685 = vld [vmem:[#allocation16 + $0x8] sm:$0xf]
    %v686 = vld [vmem:[#allocation16 + $0xc] sm:$0xf]
    %v687 = vld [vmem:[#allocation16 + $0x10] sm:$0xf]
    %v688 = vld [vmem:[#allocation16 + $0x14] sm:$0xf]
    %v689 = vld [vmem:[#allocation16 + $0x18] sm:$0xf]
    %v690 = vld [vmem:[#allocation16 + $0x1c] sm:$0xf]
    %v691 = vld [vmem:[#allocation16 + $0x20] sm:$0xf]
    %v692 = vld [vmem:[#allocation16 + $0x24] sm:$0xf]
    %v693 = vld [vmem:[#allocation16 + $0x28] sm:$0xf]
    %v694 = vld [vmem:[#allocation16 + $0x2c] sm:$0xf]
    %v695 = vld [vmem:[#allocation16 + $0x30] sm:$0xf]
    %v696 = vld [vmem:[#allocation16 + $0x34] sm:$0xf]
    %v697 = vld [vmem:[#allocation16 + $0x38] sm:$0xf]
    %v698 = vld [vmem:[#allocation16 + $0x3c] sm:$0xf]
    %v715 = vunpack.c.l.b16 %v683
    %v716 = vunpack.c.l.b16 %v684
    %v717 = vunpack.c.l.b16 %v685
    %v718 = vunpack.c.l.b16 %v686
    %v719 = vunpack.c.l.b16 %v687
    %v720 = vunpack.c.l.b16 %v688
    %v721 = vunpack.c.l.b16 %v689
    %v722 = vunpack.c.l.b16 %v690
    %v723 = vunpack.c.l.b16 %v691
    %v724 = vunpack.c.l.b16 %v692
    %v725 = vunpack.c.l.b16 %v693
    %v726 = vunpack.c.l.b16 %v694
    %v727 = vunpack.c.l.b16 %v695
    %v728 = vunpack.c.l.b16 %v696
    %v729 = vunpack.c.l.b16 %v697
    %v730 = vunpack.c.l.b16 %v698
    %v731 = vpack.c.b16 %v716, %v715
    %v732 = vpack.c.b16 %v718, %v717
    %v733 = vpack.c.b16 %v720, %v719
    %v734 = vpack.c.b16 %v722, %v721
    %v735 = vpack.c.b16 %v724, %v723
    %v736 = vpack.c.b16 %v726, %v725
    %v737 = vpack.c.b16 %v728, %v727
    %v738 = vpack.c.b16 %v730, %v729
    %747 = vmatprep.subr.bf16.mxu0 0
    %748 = vmatpush1.bf16.msra.mxu0 %v731
    %749 = vmatprep.subr.bf16.mxu0 0
    %750 = vmatpush1.bf16.msra.mxu0 %v732
    %751 = vmatprep.subr.bf16.mxu0 0
    %752 = vmatpush1.bf16.msra.mxu0 %v733
    %753 = vmatprep.subr.bf16.mxu0 0
    %754 = vmatpush1.bf16.msra.mxu0 %v734
    %755 = vmatprep.subr.bf16.mxu0 0
    %756 = vmatpush1.bf16.msra.mxu0 %v735
    %757 = vmatprep.subr.bf16.mxu0 0
    %758 = vmatpush1.bf16.msra.mxu0 %v736
    %759 = vmatprep.subr.bf16.mxu0 0
    %760 = vmatpush1.bf16.msra.mxu0 %v737
    %761 = vmatprep.subr.bf16.mxu0 0
    %762 = vmatpush1.bf16.msra.mxu0 %v738
    %763 = vmatprep.subr.bf16.mxu0 0
    %764 = vmatpush1.bf16.msra.mxu0 0
    %765 = vmatprep.subr.bf16.mxu0 0
    %766 = vmatpush1.bf16.msra.mxu0 0
    %767 = vmatprep.subr.bf16.mxu0 0
    %768 = vmatpush1.bf16.msra.mxu0 0
    %769 = vmatprep.subr.bf16.mxu0 0
    %770 = vmatpush1.bf16.msra.mxu0 0
    %771 = vmatprep.subr.bf16.mxu0 0
    %772 = vmatpush1.bf16.msra.mxu0 0
    %773 = vmatprep.subr.bf16.mxu0 0
    %774 = vmatpush1.bf16.msra.mxu0 0
    %775 = vmatprep.subr.bf16.mxu0 0
    %776 = vmatpush1.bf16.msra.mxu0 0
    %777 = vmatprep.subr.bf16.mxu0 0
    %778 = vmatpush1.bf16.msra.mxu0 0
    %779 = vmatprep.mubr.bf16.mxu0 0
    %780 = vmatmul.mubr.bf16.gmra.mrb[0].mxu0 %v682
    %v781 = vpop.f32.mrb[0].mxu0
    %v782 = vadd.f32 0.0, %v781
    %v783 = vpop.f32.mrb[0].mxu0
    %v784 = vpop.f32.mrb[0].mxu0
    %v785 = vpop.f32.mrb[0].mxu0
    %786 = vdwg.mxu0
    %v803 = vunpack.c.l.b16 %v665
    %v804 = vunpack.c.l.b16 %v666
    %v805 = vunpack.c.l.b16 %v667
    %v806 = vunpack.c.l.b16 %v668
    %v807 = vunpack.c.l.b16 %v669
    %v808 = vunpack.c.l.b16 %v670
    %v809 = vunpack.c.l.b16 %v671
    %v810 = vunpack.c.l.b16 %v672
    %v811 = vunpack.c.l.b16 %v673
    %v812 = vunpack.c.l.b16 %v674
    %v813 = vunpack.c.l.b16 %v675
    %v814 = vunpack.c.l.b16 %v676
    %v815 = vunpack.c.l.b16 %v677
    %v816 = vunpack.c.l.b16 %v678
    %v817 = vunpack.c.l.b16 %v679
    %v818 = vunpack.c.l.b16 %v680
    %v819 = vpack.c.b16 %v804, %v803
    %v820 = vpack.c.b16 %v806, %v805
    %v821 = vpack.c.b16 %v808, %v807
    %v822 = vpack.c.b16 %v810, %v809
    %v823 = vpack.c.b16 %v812, %v811
    %v824 = vpack.c.b16 %v814, %v813
    %v825 = vpack.c.b16 %v816, %v815
    %v826 = vpack.c.b16 %v818, %v817
    %835 = vmatprep.subr.bf16.mxu0 0
    %836 = vmatpush1.bf16.msra.mxu0 %v819
    %837 = vmatprep.subr.bf16.mxu0 0
    %838 = vmatpush1.bf16.msra.mxu0 %v820
    %839 = vmatprep.subr.bf16.mxu0 0
    %840 = vmatpush1.bf16.msra.mxu0 %v821
    %841 = vmatprep.subr.bf16.mxu0 0
    %842 = vmatpush1.bf16.msra.mxu0 %v822
    %843 = vmatprep.subr.bf16.mxu0 0
    %844 = vmatpush1.bf16.msra.mxu0 %v823
    %845 = vmatprep.subr.bf16.mxu0 0
    %846 = vmatpush1.bf16.msra.mxu0 %v824
    %847 = vmatprep.subr.bf16.mxu0 0
    %848 = vmatpush1.bf16.msra.mxu0 %v825
    %849 = vmatprep.subr.bf16.mxu0 0
    %850 = vmatpush1.bf16.msra.mxu0 %v826
    %851 = vmatprep.subr.bf16.mxu0 0
    %852 = vmatpush1.bf16.msra.mxu0 0
    %853 = vmatprep.subr.bf16.mxu0 0
    %854 = vmatpush1.bf16.msra.mxu0 0
    %855 = vmatprep.subr.bf16.mxu0 0
    %856 = vmatpush1.bf16.msra.mxu0 0
    %857 = vmatprep.subr.bf16.mxu0 0
    %858 = vmatpush1.bf16.msra.mxu0 0
    %859 = vmatprep.subr.bf16.mxu0 0
    %860 = vmatpush1.bf16.msra.mxu0 0
    %861 = vmatprep.subr.bf16.mxu0 0
    %862 = vmatpush1.bf16.msra.mxu0 0
    %863 = vmatprep.subr.bf16.mxu0 0
    %864 = vmatpush1.bf16.msra.mxu0 0
    %865 = vmatprep.subr.bf16.mxu0 0
    %866 = vmatpush1.bf16.msra.mxu0 0
    %867 = vmatprep.mubr.bf16.mxu0 0
    %868 = vmatmul.mubr.bf16.gmra.mrb[0].mxu0 %v664
    %v869 = vpop.f32.mrb[0].mxu0
    %v870 = vadd.f32 %v782, %v869
    %v871 = vpop.f32.mrb[0].mxu0
    %v872 = vpop.f32.mrb[0].mxu0
    %v873 = vpop.f32.mrb[0].mxu0
    %874 = vdwg.mxu0
    %v875 = vld [vmem:[%s13] sm:$0x1]
    %v877 = vlaneseq
    %v878 = vshrl.u32 %v877, 7
    %v879 = vsub.s32 0, %v878
    %v880 = vrot.slane %v875, %v879
    %v882 = vadd.f32 %v870, %v880
    %v883 = vmax.f32 %v882, 0.0
    %v884 = vpack.c.bf16 %v883, %v883
    %v885 = vld [vmem:[#allocation17] sm:$0xf]
    %v886 = vld [vmem:[#allocation17 + $0x4] sm:$0xf]
    %v887 = vld [vmem:[#allocation17 + $0x8] sm:$0xf]
    %v888 = vld [vmem:[#allocation17 + $0xc] sm:$0xf]
    %v889 = vld [vmem:[#allocation17 + $0x10] sm:$0xf]
    %v890 = vld [vmem:[#allocation17 + $0x14] sm:$0xf]
    %v891 = vld [vmem:[#allocation17 + $0x18] sm:$0xf]
    %v892 = vld [vmem:[#allocation17 + $0x1c] sm:$0xf]
    %v893 = vld [vmem:[#allocation17 + $0x20] sm:$0xf]
    %v894 = vld [vmem:[#allocation17 + $0x24] sm:$0xf]
    %v895 = vld [vmem:[#allocation17 + $0x28] sm:$0xf]
    %v896 = vld [vmem:[#allocation17 + $0x2c] sm:$0xf]
    %v897 = vld [vmem:[#allocation17 + $0x30] sm:$0xf]
    %v898 = vld [vmem:[#allocation17 + $0x34] sm:$0xf]
    %v899 = vld [vmem:[#allocation17 + $0x38] sm:$0xf]
    %v900 = vld [vmem:[#allocation17 + $0x3c] sm:$0xf]
    %v901 = vld [vmem:[%s15] sm:$0x1]
    %v903 = vlaneseq
    %v904 = vshrl.u32 %v903, 7
    %v905 = vsub.s32 0, %v904
    %v906 = vrot.slane %v901, %v905
    %v924 = vunpack.c.l.b16 %v885
    %v925 = vunpack.c.l.b16 %v886
    %v926 = vunpack.c.l.b16 %v887
    %v927 = vunpack.c.l.b16 %v888
    %v928 = vunpack.c.l.b16 %v889
    %v929 = vunpack.c.l.b16 %v890
    %v930 = vunpack.c.l.b16 %v891
    %v931 = vunpack.c.l.b16 %v892
    %v932 = vunpack.c.l.b16 %v893
    %v933 = vunpack.c.l.b16 %v894
    %v934 = vunpack.c.l.b16 %v895
    %v935 = vunpack.c.l.b16 %v896
    %v936 = vunpack.c.l.b16 %v897
    %v937 = vunpack.c.l.b16 %v898
    %v938 = vunpack.c.l.b16 %v899
    %v939 = vunpack.c.l.b16 %v900
    %v940 = vpack.c.b16 %v925, %v924
    %v941 = vpack.c.b16 %v927, %v926
    %v942 = vpack.c.b16 %v929, %v928
    %v943 = vpack.c.b16 %v931, %v930
    %v944 = vpack.c.b16 %v933, %v932
    %v945 = vpack.c.b16 %v935, %v934
    %v946 = vpack.c.b16 %v937, %v936
    %v947 = vpack.c.b16 %v939, %v938
    %956 = vmatprep.subr.bf16.mxu0 0
    %957 = vmatpush1.bf16.msra.mxu0 %v940
    %958 = vmatprep.subr.bf16.mxu0 0
    %959 = vmatpush1.bf16.msra.mxu0 %v941
    %960 = vmatprep.subr.bf16.mxu0 0
    %961 = vmatpush1.bf16.msra.mxu0 %v942
    %962 = vmatprep.subr.bf16.mxu0 0
    %963 = vmatpush1.bf16.msra.mxu0 %v943
    %964 = vmatprep.subr.bf16.mxu0 0
    %965 = vmatpush1.bf16.msra.mxu0 %v944
    %966 = vmatprep.subr.bf16.mxu0 0
    %967 = vmatpush1.bf16.msra.mxu0 %v945
    %968 = vmatprep.subr.bf16.mxu0 0
    %969 = vmatpush1.bf16.msra.mxu0 %v946
    %970 = vmatprep.subr.bf16.mxu0 0
    %971 = vmatpush1.bf16.msra.mxu0 %v947
    %972 = vmatprep.subr.bf16.mxu0 0
    %973 = vmatpush1.bf16.msra.mxu0 0
    %974 = vmatprep.subr.bf16.mxu0 0
    %975 = vmatpush1.bf16.msra.mxu0 0
    %976 = vmatprep.subr.bf16.mxu0 0
    %977 = vmatpush1.bf16.msra.mxu0 0
    %978 = vmatprep.subr.bf16.mxu0 0
    %979 = vmatpush1.bf16.msra.mxu0 0
    %980 = vmatprep.subr.bf16.mxu0 0
    %981 = vmatpush1.bf16.msra.mxu0 0
    %982 = vmatprep.subr.bf16.mxu0 0
    %983 = vmatpush1.bf16.msra.mxu0 0
    %984 = vmatprep.subr.bf16.mxu0 0
    %985 = vmatpush1.bf16.msra.mxu0 0
    %986 = vmatprep.subr.bf16.mxu0 0
    %987 = vmatpush1.bf16.msra.mxu0 0
    %988 = vmatprep.mubr.bf16.mxu0 0
    %989 = vmatmul.mubr.bf16.gmra.mrb[0].mxu0 %v884
    %v990 = vpop.f32.mrb[0].mxu0
    %v991 = vadd.f32 %v906, %v990
    %v992 = vpop.f32.mrb[0].mxu0
    %v993 = vpop.f32.mrb[0].mxu0
    %v994 = vpop.f32.mrb[0].mxu0
    %995 = vdwg.mxu0
    %v996 = vmax.f32 %v991, 0.0
    %v997 = vpack.c.bf16 %v996, %v996
    %v998 = vld [vmem:[#allocation19] sm:$0xf]
    %v999 = vld [vmem:[#allocation19 + $0x4] sm:$0xf]
    %v1000 = vld [vmem:[#allocation19 + $0x8] sm:$0xf]
    %v1001 = vld [vmem:[#allocation19 + $0xc] sm:$0xf]
    %v1002 = vld [vmem:[#allocation19 + $0x10] sm:$0xf]
    %v1003 = vld [vmem:[#allocation19 + $0x14] sm:$0xf]
    %v1004 = vld [vmem:[#allocation19 + $0x18] sm:$0xf]
    %v1005 = vld [vmem:[#allocation19 + $0x1c] sm:$0xf]
    %v1006 = vld [vmem:[#allocation19 + $0x20] sm:$0xf]
    %v1007 = vld [vmem:[#allocation19 + $0x24] sm:$0xf]
    %v1008 = vld [vmem:[#allocation19 + $0x28] sm:$0xf]
    %v1009 = vld [vmem:[#allocation19 + $0x2c] sm:$0xf]
    %v1010 = vld [vmem:[#allocation19 + $0x30] sm:$0xf]
    %v1011 = vld [vmem:[#allocation19 + $0x34] sm:$0xf]
    %v1012 = vld [vmem:[#allocation19 + $0x38] sm:$0xf]
    %v1013 = vld [vmem:[#allocation19 + $0x3c] sm:$0xf]
    %v1014 = vld [vmem:[%s17] sm:$0x1]
    %v1016 = vlaneseq
    %v1017 = vshrl.u32 %v1016, 7
    %v1018 = vsub.s32 0, %v1017
    %v1019 = vrot.slane %v1014, %v1018
    %v1037 = vunpack.c.l.b16 %v998
    %v1038 = vunpack.c.l.b16 %v999
    %v1039 = vunpack.c.l.b16 %v1000
    %v1040 = vunpack.c.l.b16 %v1001
    %v1041 = vunpack.c.l.b16 %v1002
    %v1042 = vunpack.c.l.b16 %v1003
    %v1043 = vunpack.c.l.b16 %v1004
    %v1044 = vunpack.c.l.b16 %v1005
    %v1045 = vunpack.c.l.b16 %v1006
    %v1046 = vunpack.c.l.b16 %v1007
    %v1047 = vunpack.c.l.b16 %v1008
    %v1048 = vunpack.c.l.b16 %v1009
    %v1049 = vunpack.c.l.b16 %v1010
    %v1050 = vunpack.c.l.b16 %v1011
    %v1051 = vunpack.c.l.b16 %v1012
    %v1052 = vunpack.c.l.b16 %v1013
    %v1053 = vpack.c.b16 %v1038, %v1037
    %v1054 = vpack.c.b16 %v1040, %v1039
    %v1055 = vpack.c.b16 %v1042, %v1041
    %v1056 = vpack.c.b16 %v1044, %v1043
    %v1057 = vpack.c.b16 %v1046, %v1045
    %v1058 = vpack.c.b16 %v1048, %v1047
    %v1059 = vpack.c.b16 %v1050, %v1049
    %v1060 = vpack.c.b16 %v1052, %v1051
    %1069 = vmatprep.subr.bf16.mxu0 0
    %1070 = vmatpush1.bf16.msra.mxu0 %v1053
    %1071 = vmatprep.subr.bf16.mxu0 0
    %1072 = vmatpush1.bf16.msra.mxu0 %v1054
    %1073 = vmatprep.subr.bf16.mxu0 0
    %1074 = vmatpush1.bf16.msra.mxu0 %v1055
    %1075 = vmatprep.subr.bf16.mxu0 0
    %1076 = vmatpush1.bf16.msra.mxu0 %v1056
    %1077 = vmatprep.subr.bf16.mxu0 0
    %1078 = vmatpush1.bf16.msra.mxu0 %v1057
    %1079 = vmatprep.subr.bf16.mxu0 0
    %1080 = vmatpush1.bf16.msra.mxu0 %v1058
    %1081 = vmatprep.subr.bf16.mxu0 0
    %1082 = vmatpush1.bf16.msra.mxu0 %v1059
    %1083 = vmatprep.subr.bf16.mxu0 0
    %1084 = vmatpush1.bf16.msra.mxu0 %v1060
    %1085 = vmatprep.subr.bf16.mxu0 0
    %1086 = vmatpush1.bf16.msra.mxu0 0
    %1087 = vmatprep.subr.bf16.mxu0 0
    %1088 = vmatpush1.bf16.msra.mxu0 0
    %1089 = vmatprep.subr.bf16.mxu0 0
    %1090 = vmatpush1.bf16.msra.mxu0 0
    %1091 = vmatprep.subr.bf16.mxu0 0
    %1092 = vmatpush1.bf16.msra.mxu0 0
    %1093 = vmatprep.subr.bf16.mxu0 0
    %1094 = vmatpush1.bf16.msra.mxu0 0
    %1095 = vmatprep.subr.bf16.mxu0 0
    %1096 = vmatpush1.bf16.msra.mxu0 0
    %1097 = vmatprep.subr.bf16.mxu0 0
    %1098 = vmatpush1.bf16.msra.mxu0 0
    %1099 = vmatprep.subr.bf16.mxu0 0
    %1100 = vmatpush1.bf16.msra.mxu0 0
    %1101 = vmatprep.mubr.bf16.mxu0 0
    %1102 = vmatmul.mubr.bf16.gmra.mrb[0].mxu0 %v997
    %v1103 = vpop.f32.mrb[0].mxu0
    %v1104 = vadd.f32 %v1019, %v1103
    %v1105 = vpop.f32.mrb[0].mxu0
    %v1106 = vpop.f32.mrb[0].mxu0
    %v1107 = vpop.f32.mrb[0].mxu0
    %1108 = vdwg.mxu0
    %1109 = vst [vmem:[#allocation20] sm:$0xff] %v1104
    %1110 = vst [vmem:[#allocation21] sm:$0xff] %v542
    %1111 = vst [vmem:[#allocation23] sm:$0xff] %v653
    // Predicated region
    $region118: #{tpu_custom_call.1} parent=1 // pred_check
      _
    $region119: #{tpu_custom_call.1} parent=1 // pred_check_branch
      %1113 = sbr.rel (0) target = $region121
    $region120: #{tpu_custom_call.1} parent=1 // pred_region
      %s1115 = ssub.s32 128, 128
      %1116 = vsyncadd [#allocation4], %s1115
      %s1118 = sshll.u32 [#allocation20], 4
      %s1119 = int_to_ptr.vmem [resolvable:$true] %s1118
      %1121 = dma.vmem_to_hbm [thread:$0]  %s1119, 128, %s18, [#allocation4]
    $region121: #{tpu_custom_call.1} parent=1 // pred_fallthru
      _
    // Predicated region
    $region122: #{tpu_custom_call.1} parent=1 // pred_check
      _
    $region123: #{tpu_custom_call.1} parent=1 // pred_check_branch
      %1123 = sbr.rel (0) target = $region125
    $region124: #{tpu_custom_call.1} parent=1 // pred_region
      %s1125 = ssub.s32 128, 128
      %1126 = vsyncadd [#allocation22], %s1125
      %s1128 = sshll.u32 [#allocation21], 4
      %s1129 = int_to_ptr.vmem [resolvable:$true] %s1128
      %1131 = dma.vmem_to_hbm [thread:$0]  %s1129, 128, %s19, [#allocation22]
    $region125: #{tpu_custom_call.1} parent=1 // pred_fallthru
      _
    // Predicated region
    $region126: #{tpu_custom_call.1} parent=1 // pred_check
      _
    $region127: #{tpu_custom_call.1} parent=1 // pred_check_branch
      %1133 = sbr.rel (0) target = $region129
    $region128: #{tpu_custom_call.1} parent=1 // pred_region
      %s1135 = ssub.s32 128, 128
      %1136 = vsyncadd [#allocation22], %s1135
      %s1138 = sshll.u32 [#allocation23], 4
      %s1139 = int_to_ptr.vmem [resolvable:$true] %s1138
      %1141 = dma.vmem_to_hbm [thread:$0]  %s1139, 128, %s20, [#allocation22]
    $region129: #{tpu_custom_call.1} parent=1 // pred_fallthru
      _
    // Predicated region
    $region130: #{tpu_custom_call.1} parent=1 // pred_check
      _
    $region131: #{tpu_custom_call.1} parent=1 // pred_check_branch
      %1143 = sbr.rel (0) target = $region133
    $region132: #{tpu_custom_call.1} parent=1 // pred_region
      %1144 = dma.done [#allocation4], 128
    $region133: #{tpu_custom_call.1} parent=1 // pred_fallthru
      _
    // Predicated region
    $region134: #{tpu_custom_call.1} parent=1 // pred_check
      _
    $region135: #{tpu_custom_call.1} parent=1 // pred_check_branch
      %1146 = sbr.rel (0) target = $region137
    $region136: #{tpu_custom_call.1} parent=1 // pred_region
      %1147 = dma.done [#allocation22], 128
    $region137: #{tpu_custom_call.1} parent=1 // pred_fallthru
      _
    // Predicated region
    $region138: #{tpu_custom_call.1} parent=1 // pred_check
      _
    $region139: #{tpu_custom_call.1} parent=1 // pred_check_branch
      %1149 = sbr.rel (0) target = $region141
    $region140: #{tpu_custom_call.1} parent=1 // pred_region
      %1150 = dma.done [#allocation22], 128
    $region141: #{tpu_custom_call.1} parent=1 // pred_fallthru
      _
    %1151 = vsyncpa [#allocation3], 1
    %1152 = vsyncpa [#allocation6], 1
    %1153 = vsyncpa [#allocation9], 1
    %1154 = vsyncpa [#allocation12], 1
    %1155 = vsyncpa [#allocation15], 1
    %1156 = vsyncpa [#allocation18], 1
    %1157 = vsyncpa [#allocation4], 1
    %1158 = vsyncpa [#allocation22], 1

</llo_original>
